<compile_context>
chip_gen: v7x
topology: tpu7x:2x2x1
jax: 0.10.0
libtpu: 0.0.40
codegen_flags: <defaults>
</compile_context>

<pallas_src>
import jax
import jax.numpy as jnp
from jax.experimental import pallas as pl
from jax.experimental.pallas import tpu as pltpu

HIDDEN = 256
HEAD_LANES = 128  # padded, lane-dense head output: [mean(0..A-1) | value(A) | zeros]


# ---------------------------------------------------------------------------
# Kernel
# ---------------------------------------------------------------------------
def actor_critic_kernel(state_ref, w1_ref, wh_ref, whd_ref, bias_ref, out_ref):
    hidden = w1_ref.shape[1]            # 256
    head_lanes = whd_ref.shape[1]       # 128

    x = state_ref[...]                  # (TB, S)
    bias = bias_ref[...]                # (3, 2*hidden), statically sliced below
    b1 = bias[0:1, 0:hidden]            # (1, 256)
    bh = bias[1:2, :]                   # (1, 512)  = [ba1 | bc1]
    bhd = bias[2:3, 0:head_lanes]       # (1, 128)  = [ba2 | bc2 | zeros]

    # features = ReLU(state @ W1 + b1)
    h = jnp.dot(x, w1_ref[...], preferred_element_type=jnp.float32) + b1
    h = jnp.maximum(h, 0.0)

    # fused actor/critic hidden layer: [a1 | c1] = ReLU(h @ [Wa1 | Wc1] + [ba1 | bc1])
    hc = jnp.dot(h, wh_ref[...], preferred_element_type=jnp.float32) + bh
    hc = jnp.maximum(hc, 0.0)           # (TB, 512)

    # fused block-diagonal heads -> lane-dense slab: [mean | value | zeros]
    out_ref[...] = (
        jnp.dot(hc, whd_ref[...], preferred_element_type=jnp.float32) + bhd
    )


# ---------------------------------------------------------------------------
# Wrapper
# ---------------------------------------------------------------------------
def actor_critic_forward(state, packed, *, block_b=128):
    B, S = state.shape
    A = packed["action_dim"]
    H = packed["w1"].shape[1]
    assert A + 1 <= HEAD_LANES, "action_dim + 1 must fit in the 128-lane head slab"

    # Pad batch to a multiple of the batch tile (tail guard).
    Bp = pl.cdiv(B, block_b) * block_b
    if Bp != B:
        state = jnp.pad(state, ((0, Bp - B), (0, 0)))

    flops = 2 * Bp * (S * H + H * 2 * H + 2 * H * HEAD_LANES)
    bytes_accessed = 4 * (
        packed["w1"].size + packed["w_hidden"].size + packed["w_head"].size
        + packed["bias"].size + Bp * (S + HEAD_LANES)
    )

    out = pl.pallas_call(
        actor_critic_kernel,
        out_shape=jax.ShapeDtypeStruct((Bp, HEAD_LANES), jnp.float32),
        grid_spec=pltpu.PrefetchScalarGridSpec(
            num_scalar_prefetch=0,
            grid=(Bp // block_b,),
            in_specs=[
                pl.BlockSpec((block_b, S), lambda i: (i, 0)),       # state tile
                pl.BlockSpec((S, H), lambda i: (0, 0)),             # W1 (resident)
                pl.BlockSpec((H, 2 * H), lambda i: (0, 0)),         # [Wa1|Wc1]
                pl.BlockSpec((2 * H, HEAD_LANES), lambda i: (0, 0)),# block-diag heads
                pl.BlockSpec((3, 2 * H), lambda i: (0, 0)),         # bias slab
            ],
            out_specs=pl.BlockSpec((block_b, HEAD_LANES), lambda i: (i, 0)),
        ),
        compiler_params=pltpu.CompilerParams(
            dimension_semantics=("parallel",),   # shards batch across v7x's 2 TCs
        ),
        cost_estimate=pl.CostEstimate(
            flops=flops, transcendentals=0, bytes_accessed=bytes_accessed
        ),
    )(state, packed["w1"], packed["w_hidden"], packed["w_head"], packed["bias"])

    mean = out[:B, 0:A]
    value = out[:B, A:A + 1]
    # std = exp(log_std) is state-independent: hoisted out of the kernel.
    std = jnp.broadcast_to(jnp.exp(packed["log_std"]), (B, A))
    return mean, std, value


# ---------------------------------------------------------------------------
# Parameter construction (raw = PyTorch-like layout, packed = kernel layout)
# ---------------------------------------------------------------------------
def init_params(key, state_dim, action_dim, hidden=HIDDEN):
    ks = jax.random.split(key, 10)

    def lin(kw, fan_in, fan_out):
        bound = 1.0 / jnp.sqrt(fan_in)
        return jax.random.uniform(kw, (fan_in, fan_out), jnp.float32, -bound, bound)

    return {
        "w1": lin(ks[0], state_dim, hidden),
        "b1": jax.random.uniform(ks[1], (1, hidden), jnp.float32, -0.1, 0.1),
        "wa1": lin(ks[2], hidden, hidden),
        "ba1": jax.random.uniform(ks[3], (1, hidden), jnp.float32, -0.1, 0.1),
        "wa2": lin(ks[4], hidden, action_dim),
        "ba2": jax.random.uniform(ks[5], (1, action_dim), jnp.float32, -0.1, 0.1),
        "wc1": lin(ks[6], hidden, hidden),
        "bc1": jax.random.uniform(ks[7], (1, hidden), jnp.float32, -0.1, 0.1),
        "wc2": lin(ks[8], hidden, 1),
        "bc2": jax.random.uniform(ks[9], (1, 1), jnp.float32, -0.1, 0.1),
        "log_std": jnp.zeros((1, action_dim), jnp.float32),
    }


def pack_params(raw, action_dim):
    H = raw["w1"].shape[1]

    # Fused hidden layer: [Wa1 | Wc1], [ba1 | bc1]
    w_hidden = jnp.concatenate([raw["wa1"], raw["wc1"]], axis=1)      # (H, 2H)
    b_hidden = jnp.concatenate([raw["ba1"], raw["bc1"]], axis=1)      # (1, 2H)

    # Fused block-diagonal heads -> 128-lane output [mean | value | zeros]
    w_head = jnp.zeros((2 * H, HEAD_LANES), jnp.float32)
    w_head = w_head.at[:H, :action_dim].set(raw["wa2"])
    w_head = w_head.at[H:, action_dim:action_dim + 1].set(raw["wc2"])
    b_head = jnp.zeros((1, HEAD_LANES), jnp.float32)
    b_head = b_head.at[:, :action_dim].set(raw["ba2"])
    b_head = b_head.at[:, action_dim:action_dim + 1].set(raw["bc2"])

    # All biases in one slab (rows: b1, b_hidden, b_head; zero-padded).
    bias = jnp.zeros((3, 2 * H), jnp.float32)
    bias = bias.at[0, :H].set(raw["b1"][0])
    bias = bias.at[1, :].set(b_hidden[0])
    bias = bias.at[2, :HEAD_LANES].set(b_head[0])

    return {
        "w1": raw["w1"],
        "w_hidden": w_hidden,
        "w_head": w_head,
        "bias": bias,
        "log_std": raw["log_std"],
        "action_dim": action_dim,
    }


def reference_forward(state, p):
    # Pure-JAX reference mirroring the PyTorch module.
    h = jnp.maximum(state @ p["w1"] + p["b1"], 0.0)
    a1 = jnp.maximum(h @ p["wa1"] + p["ba1"], 0.0)
    mean = a1 @ p["wa2"] + p["ba2"]
    std = jnp.broadcast_to(jnp.exp(p["log_std"]), mean.shape)
    c1 = jnp.maximum(h @ p["wc1"] + p["bc1"], 0.0)
    value = c1 @ p["wc2"] + p["bc2"]
    return mean, std, value


# TODO(synk): get_action() (Normal sampling, tanh squash, log_prob/entropy) is
# host-side distribution logic and is intentionally not part of this kernel.

if __name__ == "__main__":
    key = jax.random.PRNGKey(0)
    k_state, k_params = jax.random.split(key)

    B, STATE_DIM, ACTION_DIM = 200, 32, 8   # B not a multiple of 128 -> tests padding
    MAX_ACTION = 2.0  # only used in get_action(), not in forward()

    state = jax.random.normal(k_state, (B, STATE_DIM), jnp.float32)
    raw = init_params(k_params, STATE_DIM, ACTION_DIM)
    packed = pack_params(raw, ACTION_DIM)

    mean, std, value = actor_critic_forward(state, packed, block_b=128)
    jax.block_until_ready((mean, std, value))

    ref_mean, ref_std, ref_value = reference_forward(state, raw)
    assert mean.shape == (B, ACTION_DIM)
    assert std.shape == (B, ACTION_DIM)
    assert value.shape == (B, 1)
    assert jnp.allclose(mean, ref_mean, atol=1e-4, rtol=1e-4)
    assert jnp.allclose(std, ref_std, atol=1e-6, rtol=1e-6)
    assert jnp.allclose(value, ref_value, atol=1e-4, rtol=1e-4)

    print("KERNEL_OK")
</pallas_src>

<mosaic_0001>
module attributes {stable_mosaic.version = 11 : i64} {
  func.func @actor_critic_kernel(%arg0: i32, %arg1: memref<128x32xf32, #tpu.memory_space<vmem>>, %arg2: memref<32x256xf32, #tpu.memory_space<vmem>>, %arg3: memref<256x512xf32, #tpu.memory_space<vmem>>, %arg4: memref<512x128xf32, #tpu.memory_space<vmem>>, %arg5: memref<3x512xf32, #tpu.memory_space<vmem>>, %arg6: memref<128x128xf32, #tpu.memory_space<vmem>>) attributes {dimension_semantics = [#tpu.dimension_semantics<parallel>], iteration_bounds = array<i64: 2>, scalar_prefetch = 0 : i64, scratch_operands = 0 : i64, tpu.core_type = #tpu.core_type<tc>, window_params = [{transform_indices = @transform_0, window_bounds = array<i64: 128, 32>}, {pipeline_mode = #tpu.pipeline_mode<synchronous>, transform_indices = @transform_1, window_bounds = array<i64: 32, 256>}, {pipeline_mode = #tpu.pipeline_mode<synchronous>, transform_indices = @transform_2, window_bounds = array<i64: 256, 512>}, {pipeline_mode = #tpu.pipeline_mode<synchronous>, transform_indices = @transform_3, window_bounds = array<i64: 512, 128>}, {pipeline_mode = #tpu.pipeline_mode<synchronous>, transform_indices = @transform_4, window_bounds = array<i64: 3, 512>}, {transform_indices = @transform_5, window_bounds = array<i64: 128, 128>}]} {
    %c0 = arith.constant 0 : index
    %c0_0 = arith.constant 0 : index
    %0 = vector.load %arg1[%c0, %c0_0] : memref<128x32xf32, #tpu.memory_space<vmem>>, vector<128x32xf32>
    %c0_1 = arith.constant 0 : index
    %c0_2 = arith.constant 0 : index
    %1 = vector.load %arg5[%c0_1, %c0_2] : memref<3x512xf32, #tpu.memory_space<vmem>>, vector<3x512xf32>
    %2 = vector.extract_strided_slice %1 {offsets = [0, 0], sizes = [1, 256], strides = [1, 1]} : vector<3x512xf32> to vector<1x256xf32>
    %3 = vector.extract_strided_slice %1 {offsets = [1, 0], sizes = [1, 512], strides = [1, 1]} : vector<3x512xf32> to vector<1x512xf32>
    %4 = vector.extract_strided_slice %1 {offsets = [2, 0], sizes = [1, 128], strides = [1, 1]} : vector<3x512xf32> to vector<1x128xf32>
    %c0_3 = arith.constant 0 : index
    %c0_4 = arith.constant 0 : index
    %5 = vector.load %arg2[%c0_3, %c0_4] : memref<32x256xf32, #tpu.memory_space<vmem>>, vector<32x256xf32>
    %cst = arith.constant dense<0.000000e+00> : vector<128x256xf32>
    %6 = tpu.matmul %0, %5, %cst {dimension_numbers = #tpu.dot_dimension_numbers<[1], [0], [0], [1], [0, 0, 1, 1], [], []>} : vector<128x32xf32>, vector<32x256xf32>, vector<128x256xf32> -> vector<128x256xf32>
    %7 = vector.broadcast %2 : vector<1x256xf32> to vector<128x256xf32>
    %8 = arith.addf %6, %7 : vector<128x256xf32>
    %cst_5 = arith.constant 0.000000e+00 : f32
    %9 = vector.broadcast %cst_5 : f32 to vector<128x256xf32>
    %10 = arith.maximumf %8, %9 : vector<128x256xf32>
    %c0_6 = arith.constant 0 : index
    %c0_7 = arith.constant 0 : index
    %11 = vector.load %arg3[%c0_6, %c0_7] : memref<256x512xf32, #tpu.memory_space<vmem>>, vector<256x512xf32>
    %cst_8 = arith.constant dense<0.000000e+00> : vector<128x512xf32>
    %12 = tpu.matmul %10, %11, %cst_8 {dimension_numbers = #tpu.dot_dimension_numbers<[1], [0], [0], [1], [0, 0, 1, 1], [], []>} : vector<128x256xf32>, vector<256x512xf32>, vector<128x512xf32> -> vector<128x512xf32>
    %13 = vector.broadcast %3 : vector<1x512xf32> to vector<128x512xf32>
    %14 = arith.addf %12, %13 : vector<128x512xf32>
    %cst_9 = arith.constant 0.000000e+00 : f32
    %15 = vector.broadcast %cst_9 : f32 to vector<128x512xf32>
    %16 = arith.maximumf %14, %15 : vector<128x512xf32>
    %c0_10 = arith.constant 0 : index
    %c0_11 = arith.constant 0 : index
    %17 = vector.load %arg4[%c0_10, %c0_11] : memref<512x128xf32, #tpu.memory_space<vmem>>, vector<512x128xf32>
    %cst_12 = arith.constant dense<0.000000e+00> : vector<128x128xf32>
    %18 = tpu.matmul %16, %17, %cst_12 {dimension_numbers = #tpu.dot_dimension_numbers<[1], [0], [0], [1], [0, 0, 1, 1], [], []>} : vector<128x512xf32>, vector<512x128xf32>, vector<128x128xf32> -> vector<128x128xf32>
    %19 = vector.broadcast %4 : vector<1x128xf32> to vector<128x128xf32>
    %20 = arith.addf %18, %19 : vector<128x128xf32>
    %c0_13 = arith.constant 0 : index
    %c0_14 = arith.constant 0 : index
    %21 = vector.load %arg6[%c0_13, %c0_14] : memref<128x128xf32, #tpu.memory_space<vmem>>, vector<128x128xf32>
    tpu.vector_store %arg6[%c0_13, %c0_14], %20 {strides = array<i32>} : memref<128x128xf32, #tpu.memory_space<vmem>>, vector<128x128xf32>,
    return
  }
  func.func @transform_0(%arg0: i32) -> (i32, i32) {
    %c0_i32 = arith.constant 0 : i32
    %c0_i32_0 = arith.constant 0 : i32
    return %arg0, %c0_i32 : i32, i32
  }
  func.func @transform_1(%arg0: i32) -> (i32, i32) {
    %c0_i32 = arith.constant 0 : i32
    %c0_i32_0 = arith.constant 0 : i32
    %c0_i32_1 = arith.constant 0 : i32
    return %c0_i32, %c0_i32_0 : i32, i32
  }
  func.func @transform_2(%arg0: i32) -> (i32, i32) {
    %c0_i32 = arith.constant 0 : i32
    %c0_i32_0 = arith.constant 0 : i32
    %c0_i32_1 = arith.constant 0 : i32
    return %c0_i32, %c0_i32_0 : i32, i32
  }
  func.func @transform_3(%arg0: i32) -> (i32, i32) {
    %c0_i32 = arith.constant 0 : i32
    %c0_i32_0 = arith.constant 0 : i32
    %c0_i32_1 = arith.constant 0 : i32
    return %c0_i32, %c0_i32_0 : i32, i32
  }
  func.func @transform_4(%arg0: i32) -> (i32, i32) {
    %c0_i32 = arith.constant 0 : i32
    %c0_i32_0 = arith.constant 0 : i32
    %c0_i32_1 = arith.constant 0 : i32
    return %c0_i32, %c0_i32_0 : i32, i32
  }
  func.func @transform_5(%arg0: i32) -> (i32, i32) {
    %c0_i32 = arith.constant 0 : i32
    %c0_i32_0 = arith.constant 0 : i32
    return %arg0, %c0_i32 : i32, i32
  }
}

</mosaic_0001>

<llo_original>
// kernel: tpu_custom_call.1
$region0: #{tpu_custom_call.1}
  #allocation0 [shape = 'u32[]', space=smem, size = 0x4, offset = 0x4, fixed_abs, tag = 'smem constant byte address 0x4 - core index']
  #allocation1 [shape = 'u32[144,128]{1,0:T(1,128)}', space=vmem, size = 0x12000, scoped, tag = 'internal scratch']
  %s0 = inlined_call_operand.vmem [shape: f32[256,32], index: 0, kind: input, shape index: {}]
  %s1 = inlined_call_operand.vmem [shape: f32[32,256], index: 1, kind: input, shape index: {}]
  %s2 = inlined_call_operand.hbm [shape: f32[256,512], index: 2, kind: input, shape index: {}]
  %s3 = inlined_call_operand.hbm [shape: f32[512,128], index: 3, kind: input, shape index: {}]
  %s4 = inlined_call_operand.vmem [shape: f32[3,512], index: 4, kind: input, shape index: {}]
  %s5 = inlined_call_operand.hbm [shape: f32[256,128], index: 5, kind: output, shape index: {}]
  %s6 = sld [smem:[#allocation0]]
  $region61: #{tpu_custom_call.1} parent=0
    _
  %s8 = ssub.s32 1, %s6
  %s9 = scalar_select 0, %s8, %s6
  $region1: #{tpu_custom_call.1} parent=0
    #allocation2 [shape = 'u8[524288]{0}', space=vmem, size = 0x80000, scoped, tag = 'input window, operand 2, single buffered']
    #allocation3 [shape = 's32[2]{0}', space=sflag, size = 0x8, scoped, tag = 'scoped memory for tpu_custom_call.1']
    #allocation4 [shape = 's32[2]{0}', space=sflag, size = 0x8, scoped, tag = 'scoped memory for tpu_custom_call.1']
    #allocation5 [shape = 'u8[262144]{0}', space=vmem, size = 0x40000, scoped, tag = 'input window, operand 3, single buffered']
    #allocation6 [shape = 's32[1]{0}', space=sflag, size = 0x4, scoped, tag = 'scoped memory for tpu_custom_call.1']
    #allocation7 [shape = 'u8[131072]{0}', space=vmem, size = 0x20000, scoped, tag = 'output window, operand 0']
    %10 = vsyncpa [#allocation3], 0
    %11 = vsyncpa [#allocation6], 0
    %12 = vsyncpa [#allocation4], 0
    %s13 = scalar_lea.sflag [#allocation4], 1
    %14 = vsyncpa %s13, 0
    loop: start=0, step=1, limit=4
    $region2: #{tpu_custom_call.1} parent=1 // loop_pre_header
      _
    $region3: #{tpu_custom_call.1} parent=1 // loop_header
      %s16 = sphi 0, %s20
      %p17 = scmp.ge.s32.totalorder %s16, 4
      %s26 = sphi 0, %s28
      %s29 = sphi 0, %s26
      %s30 = sphi 0, %s29
      %s46 = sphi 0, %s30
      %s50 = sphi 0, %s50
      %s52 = sphi 0, %s50
      %s53 = sphi 0, %s52
      %s67 = sphi 0, %s53
      %s71 = sphi 0, %s71
      %s73 = sphi 0, %s71
      %s74 = sphi 0, %s73
      %s88 = sphi 0, %s74
      %s92 = sphi 0, %s92
      %s94 = sphi 0, %s92
      %s95 = sphi 0, %s94
      %s109 = sphi 0, %s95
      %s113 = sphi 0, %s113
      %s115 = sphi 0, %s113
      %s116 = sphi 0, %s115
      %s130 = sphi 0, %s116
      %s136 = sphi 0, %s138
      %s139 = sphi 0, %s136
      %s140 = sphi 0, %s139
      %s156 = sphi 0, %s140
    $region4: #{tpu_custom_call.1} parent=1 // loop_header_branch
      %19 = sbr.rel (%p17) target = $region8
    $region5: #{tpu_custom_call.1} parent=1 // loop_body
      %s21 = ssub.s32 %s16, 1
      %s22 = ssub.s32 %s16, 2
      %s23 = sadd.s32 %s16, 1
      %s24 = ssub.s32 %s16, %s23
      %p25 = scmp.eq.s32.totalorder %s24, 0
      %s27 = sadd.s32 %s26, 1
      %s28 = scalar_select %p25, %s26, %s27
      %p31 = pneg %p25
      %p32 = scmp.eq.s32.totalorder %s16, 1
      %p33 = por %p31, %p32
      %p34 = scmp.ne.s32.totalorder %s26, %s29
      %p35 = scmp.eq.s32.totalorder %s16, 0
      %p36 = por %p34, %p35
      %p37 = scmp.ne.s32.totalorder %s26, %s29
      %p38 = scmp.eq.s32.totalorder %s21, 1
      %p39 = por %p37, %p38
      %p40 = scmp.ne.s32.totalorder %s29, %s30
      %p41 = scmp.eq.s32.totalorder %s21, 0
      %p42 = por %p40, %p41
      %p43 = scmp.ne.s32.totalorder %s29, %s30
      %p44 = scmp.eq.s32.totalorder %s22, 1
      %p45 = por %p43, %p44
      %p47 = scmp.ne.s32.totalorder %s30, %s46
      %p48 = scmp.eq.s32.totalorder %s22, 0
      %p49 = por %p47, %p48
      %s51 = sadd.s32 %s50, 1
      %p54 = scmp.eq.s32.totalorder %s16, 1
      %p55 = scmp.ne.s32.totalorder %s50, %s52
      %p56 = scmp.eq.s32.totalorder %s16, 0
      %p57 = por %p55, %p56
      %p58 = scmp.ne.s32.totalorder %s50, %s52
      %p59 = scmp.eq.s32.totalorder %s21, 1
      %p60 = por %p58, %p59
      %p61 = scmp.ne.s32.totalorder %s52, %s53
      %p62 = scmp.eq.s32.totalorder %s21, 0
      %p63 = por %p61, %p62
      %p64 = scmp.ne.s32.totalorder %s52, %s53
      %p65 = scmp.eq.s32.totalorder %s22, 1
      %p66 = por %p64, %p65
      %p68 = scmp.ne.s32.totalorder %s53, %s67
      %p69 = scmp.eq.s32.totalorder %s22, 0
      %p70 = por %p68, %p69
      %s72 = sadd.s32 %s71, 1
      %p75 = scmp.eq.s32.totalorder %s16, 1
      %p76 = scmp.ne.s32.totalorder %s71, %s73
      %p77 = scmp.eq.s32.totalorder %s16, 0
      %p78 = por %p76, %p77
      %p79 = scmp.ne.s32.totalorder %s71, %s73
      %p80 = scmp.eq.s32.totalorder %s21, 1
      %p81 = por %p79, %p80
      %p82 = scmp.ne.s32.totalorder %s73, %s74
      %p83 = scmp.eq.s32.totalorder %s21, 0
      %p84 = por %p82, %p83
      %p85 = scmp.ne.s32.totalorder %s73, %s74
      %p86 = scmp.eq.s32.totalorder %s22, 1
      %p87 = por %p85, %p86
      %p89 = scmp.ne.s32.totalorder %s74, %s88
      %p90 = scmp.eq.s32.totalorder %s22, 0
      %p91 = por %p89, %p90
      %s93 = sadd.s32 %s92, 1
      %p96 = scmp.eq.s32.totalorder %s16, 1
      %p97 = scmp.ne.s32.totalorder %s92, %s94
      %p98 = scmp.eq.s32.totalorder %s16, 0
      %p99 = por %p97, %p98
      %p100 = scmp.ne.s32.totalorder %s92, %s94
      %p101 = scmp.eq.s32.totalorder %s21, 1
      %p102 = por %p100, %p101
      %p103 = scmp.ne.s32.totalorder %s94, %s95
      %p104 = scmp.eq.s32.totalorder %s21, 0
      %p105 = por %p103, %p104
      %p106 = scmp.ne.s32.totalorder %s94, %s95
      %p107 = scmp.eq.s32.totalorder %s22, 1
      %p108 = por %p106, %p107
      %p110 = scmp.ne.s32.totalorder %s95, %s109
      %p111 = scmp.eq.s32.totalorder %s22, 0
      %p112 = por %p110, %p111
      %s114 = sadd.s32 %s113, 1
      %p117 = scmp.eq.s32.totalorder %s16, 1
      %p118 = scmp.ne.s32.totalorder %s113, %s115
      %p119 = scmp.eq.s32.totalorder %s16, 0
      %p120 = por %p118, %p119
      %p121 = scmp.ne.s32.totalorder %s113, %s115
      %p122 = scmp.eq.s32.totalorder %s21, 1
      %p123 = por %p121, %p122
      %p124 = scmp.ne.s32.totalorder %s115, %s116
      %p125 = scmp.eq.s32.totalorder %s21, 0
      %p126 = por %p124, %p125
      %p127 = scmp.ne.s32.totalorder %s115, %s116
      %p128 = scmp.eq.s32.totalorder %s22, 1
      %p129 = por %p127, %p128
      %p131 = scmp.ne.s32.totalorder %s116, %s130
      %p132 = scmp.eq.s32.totalorder %s22, 0
      %p133 = por %p131, %p132
      %s134 = ssub.s32 %s16, %s23
      %p135 = scmp.eq.s32.totalorder %s134, 0
      %s137 = sadd.s32 %s136, 1
      %s138 = scalar_select %p135, %s136, %s137
      %p141 = pneg %p135
      %p142 = scmp.eq.s32.totalorder %s16, 1
      %p143 = por %p141, %p142
      %p144 = scmp.ne.s32.totalorder %s136, %s139
      %p145 = scmp.eq.s32.totalorder %s16, 0
      %p146 = por %p144, %p145
      %p147 = scmp.ne.s32.totalorder %s136, %s139
      %p148 = scmp.eq.s32.totalorder %s21, 1
      %p149 = por %p147, %p148
      %p150 = scmp.ne.s32.totalorder %s139, %s140
      %p151 = scmp.eq.s32.totalorder %s21, 0
      %p152 = por %p150, %p151
      %p153 = scmp.ne.s32.totalorder %s139, %s140
      %p154 = scmp.eq.s32.totalorder %s22, 1
      %p155 = por %p153, %p154
      %p157 = scmp.ne.s32.totalorder %s140, %s156
      %p158 = scmp.eq.s32.totalorder %s22, 0
      %p159 = por %p157, %p158
      %p160 = scmp.le.s32.totalorder 1, %s16
      %p161 = scmp.lt.s32.totalorder %s16, 3
      %p162 = pnand %p160, %p161
      %p163 = pneg %p162
      // Predicated region
      $region9: #{tpu_custom_call.1} parent=5 // pred_check
        _
      $region10: #{tpu_custom_call.1} parent=5 // pred_check_branch
        %165 = sbr.rel (%p162) target = $region12
      $region11: #{tpu_custom_call.1} parent=5 // pred_region
        %s166 = ssub.s32 %s16, 1
        // Predicated region
        $region13: #{tpu_custom_call.1} parent=11 // pred_check
          %p167 = pneg %p63
        $region14: #{tpu_custom_call.1} parent=11 // pred_check_branch
          %169 = sbr.rel (%p167) target = $region16
        $region15: #{tpu_custom_call.1} parent=11 // pred_region
          _
        $region16: #{tpu_custom_call.1} parent=11 // pred_fallthru
          _
        // Predicated region
        $region17: #{tpu_custom_call.1} parent=11 // pred_check
          %p170 = pneg %p84
        $region18: #{tpu_custom_call.1} parent=11 // pred_check_branch
          %172 = sbr.rel (%p170) target = $region20
        $region19: #{tpu_custom_call.1} parent=11 // pred_region
          %s174 = ssub.s32 16384, 16384
          %175 = vsyncadd [#allocation3], %s174
          %s176 = sshll.u32 [#allocation2], 4
          %s177 = int_to_ptr.vmem [resolvable:$true] %s176
          %182 = dma.hbm_to_vmem [thread:$0]  %s2, 16384, %s177, [#allocation3], 512, 512, 32
        $region20: #{tpu_custom_call.1} parent=11 // pred_fallthru
          _
        // Predicated region
        $region21: #{tpu_custom_call.1} parent=11 // pred_check
          %p183 = pneg %p105
        $region22: #{tpu_custom_call.1} parent=11 // pred_check_branch
          %185 = sbr.rel (%p183) target = $region24
        $region23: #{tpu_custom_call.1} parent=11 // pred_region
          %s187 = ssub.s32 8192, 8192
          %188 = vsyncadd [#allocation6], %s187
          %s189 = sshll.u32 [#allocation5], 4
          %s190 = int_to_ptr.vmem [resolvable:$true] %s189
          %195 = dma.hbm_to_vmem [thread:$0]  %s3, 8192, %s190, [#allocation6], 128, 128, 8
        $region24: #{tpu_custom_call.1} parent=11 // pred_fallthru
          _
        // Predicated region
        $region25: #{tpu_custom_call.1} parent=11 // pred_check
          %p196 = pneg %p126
        $region26: #{tpu_custom_call.1} parent=11 // pred_check_branch
          %198 = sbr.rel (%p196) target = $region28
        $region27: #{tpu_custom_call.1} parent=11 // pred_region
          _
        $region28: #{tpu_custom_call.1} parent=11 // pred_fallthru
          _
      $region12: #{tpu_custom_call.1} parent=5 // pred_fallthru
        _
      %p199 = scmp.lt.s32.totalorder %s16, 2
      // Predicated region
      $region29: #{tpu_custom_call.1} parent=5 // pred_check
        %p200 = pneg %p199
      $region30: #{tpu_custom_call.1} parent=5 // pred_check_branch
        %202 = sbr.rel (%p200) target = $region32
      $region31: #{tpu_custom_call.1} parent=5 // pred_region
        // Predicated region
        $region33: #{tpu_custom_call.1} parent=31 // pred_check
          %p203 = pneg %p36
        $region34: #{tpu_custom_call.1} parent=31 // pred_check_branch
          %205 = sbr.rel (%p203) target = $region36
        $region35: #{tpu_custom_call.1} parent=31 // pred_region
          %s206 = smul.u32 16, %s16
          %p207 = scmp.lt.s32.totalorder %s206, 31
          %s208 = scalar_select %p207, %s206, 31
          %s209 = smul.addr %s208, 8
          %s210 = scalar_lea.vmem %s0, %s209
          %s211 = smul.u32 16, %s16
        $region36: #{tpu_custom_call.1} parent=31 // pred_fallthru
          _
      $region32: #{tpu_custom_call.1} parent=5 // pred_fallthru
        _
      %p212 = scmp.le.s32.totalorder 1, %s16
      %p213 = scmp.lt.s32.totalorder %s16, 3
      %p214 = pnand %p212, %p213
      %p215 = pneg %p214
      // Predicated region
      $region37: #{tpu_custom_call.1} parent=5 // pred_check
        _
      $region38: #{tpu_custom_call.1} parent=5 // pred_check_branch
        %217 = sbr.rel (%p214) target = $region40
      $region39: #{tpu_custom_call.1} parent=5 // pred_region
        %s218 = ssub.s32 %s16, 1
        // Predicated region
        $region41: #{tpu_custom_call.1} parent=39 // pred_check
          %p219 = pneg %p84
        $region42: #{tpu_custom_call.1} parent=39 // pred_check_branch
          %221 = sbr.rel (%p219) target = $region44
        $region43: #{tpu_custom_call.1} parent=39 // pred_region
          %222 = dma.done [#allocation3], 16384
        $region44: #{tpu_custom_call.1} parent=39 // pred_fallthru
          _
        // Predicated region
        $region45: #{tpu_custom_call.1} parent=39 // pred_check
          %p223 = pneg %p105
        $region46: #{tpu_custom_call.1} parent=39 // pred_check_branch
          %225 = sbr.rel (%p223) target = $region48
        $region47: #{tpu_custom_call.1} parent=39 // pred_region
          %226 = dma.done [#allocation6], 8192
        $region48: #{tpu_custom_call.1} parent=39 // pred_fallthru
          _
        %s227 = smul.u32 16, %s21
        %p228 = scmp.lt.s32.totalorder %s227, 31
        %s229 = scalar_select %p228, %s227, 31
        %s230 = smul.addr %s229, 8
        %s231 = scalar_lea.vmem %s0, %s230
        %p232 = pneg %p42
        %p233 = pneg %p39
        %p234 = pneg %p63
        %p235 = pneg %p60
        %p236 = pneg %p84
        %p237 = pneg %p81
        %p238 = pneg %p105
        %p239 = pneg %p102
        %p240 = pneg %p126
        %p241 = pneg %p123
        %p242 = pneg %p152
        %p243 = pneg %p149
        %s244 = sand.u32 %s139, 1
        %s245 = scalar_lea.sflag [#allocation4], %s244
        %s246 = sand.u32 %s139, 1
        %s247 = smul.addr %s246, 128
        %s248 = scalar_lea.vmem [#allocation7], %s247
        %s249 = smul.u32 16, %s21
        %p250 = scmp.lt.s32.totalorder %s249, 31
        %s251 = scalar_select %p250, %s249, 31
        %s252 = smul.addr %s251, 8
        %s253 = scalar_lea.vmem %s0, %s252
        %s254 = smul.u32 16, %s21
        %s255 = smul.u32 16, %s21
        %v256 = vld [vmem:[%s253] sm:$0xff]
        %v257 = vld [vmem:[%s253 + $0x8] sm:$0xff]
        %v258 = vld [vmem:[%s253 + $0x10] sm:$0xff]
        %v259 = vld [vmem:[%s253 + $0x18] sm:$0xff]
        %v260 = vld [vmem:[%s253 + $0x20] sm:$0xff]
        %v261 = vld [vmem:[%s253 + $0x28] sm:$0xff]
        %v262 = vld [vmem:[%s253 + $0x30] sm:$0xff]
        %v263 = vld [vmem:[%s253 + $0x38] sm:$0xff]
        %v264 = vld [vmem:[%s253 + $0x40] sm:$0xff]
        %v265 = vld [vmem:[%s253 + $0x48] sm:$0xff]
        %v266 = vld [vmem:[%s253 + $0x50] sm:$0xff]
        %v267 = vld [vmem:[%s253 + $0x58] sm:$0xff]
        %v268 = vld [vmem:[%s253 + $0x60] sm:$0xff]
        %v269 = vld [vmem:[%s253 + $0x68] sm:$0xff]
        %v270 = vld [vmem:[%s253 + $0x70] sm:$0xff]
        %v271 = vld [vmem:[%s253 + $0x78] sm:$0xff]
        %v272 = vld [vmem:[%s4] sm:$0x77]
        %v273 = vld [vmem:[%s4 + $0x8] sm:$0x77]
        %v274 = vld [vmem:[%s1] sm:$0xff]
        %v275 = vld [vmem:[%s1 + $0x8] sm:$0xff]
        %v276 = vld [vmem:[%s1 + $0x10] sm:$0xff]
        %v277 = vld [vmem:[%s1 + $0x18] sm:$0xff]
        %v278 = vld [vmem:[%s1 + $0x20] sm:$0xff]
        %v279 = vld [vmem:[%s1 + $0x28] sm:$0xff]
        %v280 = vld [vmem:[%s1 + $0x30] sm:$0xff]
        %v281 = vld [vmem:[%s1 + $0x38] sm:$0xff]
        %v283 = vlaneseq
        %v284 = vshrl.u32 %v283, 7
        %v285 = vsub.s32 0, %v284
        %v286 = vrot.slane %v272, %v285
        %v287 = vlaneseq
        %v288 = vshrl.u32 %v287, 7
        %v289 = vsub.s32 4, %v288
        %v290 = vrot.slane %v272, %v289
        %v293 = vlaneseq
        %v294 = vshrl.u32 %v293, 7
        %v295 = vsub.s32 0, %v294
        %v296 = vrot.slane %v286, %v295
        %v297 = vlaneseq
        %v298 = vshrl.u32 %v297, 7
        %v299 = vsub.s32 0, %v298
        %v300 = vrot.slane %v290, %v299
        %vm301 = vcmask 261120
        %v303 = vsel %vm301, %v256, 0
        %v306 = vsel %vm301, %v257, 0
        %v309 = vsel %vm301, %v258, 0
        %v312 = vsel %vm301, %v259, 0
        %v315 = vsel %vm301, %v260, 0
        %v318 = vsel %vm301, %v261, 0
        %v321 = vsel %vm301, %v262, 0
        %v324 = vsel %vm301, %v263, 0
        %v327 = vsel %vm301, %v264, 0
        %v330 = vsel %vm301, %v265, 0
        %v333 = vsel %vm301, %v266, 0
        %v336 = vsel %vm301, %v267, 0
        %v339 = vsel %vm301, %v268, 0
        %v342 = vsel %vm301, %v269, 0
        %v345 = vsel %vm301, %v270, 0
        %v348 = vsel %vm301, %v271, 0
        %350 = vmatprep.subr.mxu0 %v275
        %351 = vmatpush1.msra.mxu0 %v274
        %352 = vmatprep.subr.mxu0 %v277
        %353 = vmatpush1.msra.mxu0 %v276
        %354 = vmatprep.subr.mxu0 %v279
        %355 = vmatpush1.msra.mxu0 %v278
        %356 = vmatprep.subr.mxu0 %v281
        %357 = vmatpush1.msra.mxu0 %v280
        %358 = vmatprep.subr.mxu0 0.0
        %359 = vmatpush1.msra.mxu0 0.0
        %360 = vmatprep.subr.mxu0 0.0
        %361 = vmatpush1.msra.mxu0 0.0
        %362 = vmatprep.subr.mxu0 0.0
        %363 = vmatpush1.msra.mxu0 0.0
        %364 = vmatprep.subr.mxu0 0.0
        %365 = vmatpush1.msra.mxu0 0.0
        %366 = vmatprep.subr.mxu0 0.0
        %367 = vmatpush1.msra.mxu0 0.0
        %368 = vmatprep.subr.mxu0 0.0
        %369 = vmatpush1.msra.mxu0 0.0
        %370 = vmatprep.subr.mxu0 0.0
        %371 = vmatpush1.msra.mxu0 0.0
        %372 = vmatprep.subr.mxu0 0.0
        %373 = vmatpush1.msra.mxu0 0.0
        %374 = vmatprep.subr.mxu0 0.0
        %375 = vmatpush1.msra.mxu0 0.0
        %376 = vmatprep.subr.mxu0 0.0
        %377 = vmatpush1.msra.mxu0 0.0
        %378 = vmatprep.subr.mxu0 0.0
        %379 = vmatpush1.msra.mxu0 0.0
        %380 = vmatprep.subr.mxu0 0.0
        %381 = vmatpush1.msra.mxu0 0.0
        %382 = vmatprep.subr.mxu0 0.0
        %383 = vmatpush1.msra.mxu0 0.0
        %384 = vmatprep.subr.mxu0 0.0
        %385 = vmatpush1.msra.mxu0 0.0
        %386 = vmatprep.subr.mxu0 0.0
        %387 = vmatpush1.msra.mxu0 0.0
        %388 = vmatprep.subr.mxu0 0.0
        %389 = vmatpush1.msra.mxu0 0.0
        %390 = vmatprep.subr.mxu0 0.0
        %391 = vmatpush1.msra.mxu0 0.0
        %392 = vmatprep.subr.mxu0 0.0
        %393 = vmatpush1.msra.mxu0 0.0
        %394 = vmatprep.subr.mxu0 0.0
        %395 = vmatpush1.msra.mxu0 0.0
        %396 = vmatprep.subr.mxu0 0.0
        %397 = vmatpush1.msra.mxu0 0.0
        %398 = vmatprep.subr.mxu0 0.0
        %399 = vmatpush1.msra.mxu0 0.0
        %400 = vmatprep.subr.mxu0 0.0
        %401 = vmatpush1.msra.mxu0 0.0
        %402 = vmatprep.subr.mxu0 0.0
        %403 = vmatpush1.msra.mxu0 0.0
        %404 = vmatprep.subr.mxu0 0.0
        %405 = vmatpush1.msra.mxu0 0.0
        %406 = vmatprep.subr.mxu0 0.0
        %407 = vmatpush1.msra.mxu0 0.0
        %408 = vmatprep.subr.mxu0 0.0
        %409 = vmatpush1.msra.mxu0 0.0
        %410 = vmatprep.subr.mxu0 0.0
        %411 = vmatpush1.msra.mxu0 0.0
        %412 = vmatprep.subr.mxu0 0.0
        %413 = vmatpush1.msra.mxu0 0.0
        %414 = vmatprep.mubr.f32.mxu0 0.0
        %415 = vmatmul.mubr.f32.gmra.mrb[0].mxu0 %v303
        %v416 = vpop.f32.mrb[0].mxu0
        %v417 = vadd.f32 %v296, %v416
        %v418 = vpop.f32.mrb[0].mxu0
        %v419 = vadd.f32 %v300, %v418
        %420 = vmatprep.mubr.f32.mxu0 0.0
        %421 = vmatmul.mubr.f32.gmra.mrb[0].mxu0 %v306
        %v422 = vpop.f32.mrb[0].mxu0
        %v423 = vadd.f32 %v296, %v422
        %v424 = vpop.f32.mrb[0].mxu0
        %v425 = vadd.f32 %v300, %v424
        %426 = vmatprep.mubr.f32.mxu0 0.0
        %427 = vmatmul.mubr.f32.gmra.mrb[0].mxu0 %v309
        %v428 = vpop.f32.mrb[0].mxu0
        %v429 = vadd.f32 %v296, %v428
        %v430 = vpop.f32.mrb[0].mxu0
        %v431 = vadd.f32 %v300, %v430
        %432 = vmatprep.mubr.f32.mxu0 0.0
        %433 = vmatmul.mubr.f32.gmra.mrb[0].mxu0 %v312
        %v434 = vpop.f32.mrb[0].mxu0
        %v435 = vadd.f32 %v296, %v434
        %v436 = vpop.f32.mrb[0].mxu0
        %v437 = vadd.f32 %v300, %v436
        %438 = vmatprep.mubr.f32.mxu0 0.0
        %439 = vmatmul.mubr.f32.gmra.mrb[0].mxu0 %v315
        %v440 = vpop.f32.mrb[0].mxu0
        %v441 = vadd.f32 %v296, %v440
        %v442 = vpop.f32.mrb[0].mxu0
        %v443 = vadd.f32 %v300, %v442
        %444 = vmatprep.mubr.f32.mxu0 0.0
        %445 = vmatmul.mubr.f32.gmra.mrb[0].mxu0 %v318
        %v446 = vpop.f32.mrb[0].mxu0
        %v447 = vadd.f32 %v296, %v446
        %v448 = vpop.f32.mrb[0].mxu0
        %v449 = vadd.f32 %v300, %v448
        %450 = vmatprep.mubr.f32.mxu0 0.0
        %451 = vmatmul.mubr.f32.gmra.mrb[0].mxu0 %v321
        %v452 = vpop.f32.mrb[0].mxu0
        %v453 = vadd.f32 %v296, %v452
        %v454 = vpop.f32.mrb[0].mxu0
        %v455 = vadd.f32 %v300, %v454
        %456 = vmatprep.mubr.f32.mxu0 0.0
        %457 = vmatmul.mubr.f32.gmra.mrb[0].mxu0 %v324
        %v458 = vpop.f32.mrb[0].mxu0
        %v459 = vadd.f32 %v296, %v458
        %v460 = vpop.f32.mrb[0].mxu0
        %v461 = vadd.f32 %v300, %v460
        %462 = vmatprep.mubr.f32.mxu0 0.0
        %463 = vmatmul.mubr.f32.gmra.mrb[0].mxu0 %v327
        %v464 = vpop.f32.mrb[0].mxu0
        %v465 = vadd.f32 %v296, %v464
        %v466 = vpop.f32.mrb[0].mxu0
        %v467 = vadd.f32 %v300, %v466
        %468 = vmatprep.mubr.f32.mxu0 0.0
        %469 = vmatmul.mubr.f32.gmra.mrb[0].mxu0 %v330
        %v470 = vpop.f32.mrb[0].mxu0
        %v471 = vadd.f32 %v296, %v470
        %v472 = vpop.f32.mrb[0].mxu0
        %v473 = vadd.f32 %v300, %v472
        %474 = vmatprep.mubr.f32.mxu0 0.0
        %475 = vmatmul.mubr.f32.gmra.mrb[0].mxu0 %v333
        %v476 = vpop.f32.mrb[0].mxu0
        %v477 = vadd.f32 %v296, %v476
        %v478 = vpop.f32.mrb[0].mxu0
        %v479 = vadd.f32 %v300, %v478
        %480 = vmatprep.mubr.f32.mxu0 0.0
        %481 = vmatmul.mubr.f32.gmra.mrb[0].mxu0 %v336
        %v482 = vpop.f32.mrb[0].mxu0
        %v483 = vadd.f32 %v296, %v482
        %v484 = vpop.f32.mrb[0].mxu0
        %v485 = vadd.f32 %v300, %v484
        %486 = vmatprep.mubr.f32.mxu0 0.0
        %487 = vmatmul.mubr.f32.gmra.mrb[0].mxu0 %v339
        %v488 = vpop.f32.mrb[0].mxu0
        %v489 = vadd.f32 %v296, %v488
        %v490 = vpop.f32.mrb[0].mxu0
        %v491 = vadd.f32 %v300, %v490
        %492 = vmatprep.mubr.f32.mxu0 0.0
        %493 = vmatmul.mubr.f32.gmra.mrb[0].mxu0 %v342
        %v494 = vpop.f32.mrb[0].mxu0
        %v495 = vadd.f32 %v296, %v494
        %v496 = vpop.f32.mrb[0].mxu0
        %v497 = vadd.f32 %v300, %v496
        %498 = vmatprep.mubr.f32.mxu0 0.0
        %499 = vmatmul.mubr.f32.gmra.mrb[0].mxu0 %v345
        %v500 = vpop.f32.mrb[0].mxu0
        %v501 = vadd.f32 %v296, %v500
        %v502 = vpop.f32.mrb[0].mxu0
        %v503 = vadd.f32 %v300, %v502
        %504 = vmatprep.mubr.f32.mxu0 0.0
        %505 = vmatmul.mubr.f32.gmra.mrb[0].mxu0 %v348
        %v506 = vpop.f32.mrb[0].mxu0
        %v507 = vadd.f32 %v296, %v506
        %v508 = vpop.f32.mrb[0].mxu0
        %v509 = vadd.f32 %v300, %v508
        %510 = vdwg.mxu0
        %v511 = vmax.f32 %v417, 0.0
        %v512 = vmax.f32 %v419, 0.0
        %v513 = vmax.f32 %v423, 0.0
        %v514 = vmax.f32 %v425, 0.0
        %v515 = vmax.f32 %v429, 0.0
        %v516 = vmax.f32 %v431, 0.0
        %v517 = vmax.f32 %v435, 0.0
        %v518 = vmax.f32 %v437, 0.0
        %v519 = vmax.f32 %v441, 0.0
        %v520 = vmax.f32 %v443, 0.0
        %v521 = vmax.f32 %v447, 0.0
        %v522 = vmax.f32 %v449, 0.0
        %v523 = vmax.f32 %v453, 0.0
        %v524 = vmax.f32 %v455, 0.0
        %v525 = vmax.f32 %v459, 0.0
        %v526 = vmax.f32 %v461, 0.0
        %v527 = vmax.f32 %v465, 0.0
        %v528 = vmax.f32 %v467, 0.0
        %v529 = vmax.f32 %v471, 0.0
        %v530 = vmax.f32 %v473, 0.0
        %v531 = vmax.f32 %v477, 0.0
        %v532 = vmax.f32 %v479, 0.0
        %v533 = vmax.f32 %v483, 0.0
        %v534 = vmax.f32 %v485, 0.0
        %v535 = vmax.f32 %v489, 0.0
        %v536 = vmax.f32 %v491, 0.0
        %v537 = vmax.f32 %v495, 0.0
        %v538 = vmax.f32 %v497, 0.0
        %v539 = vmax.f32 %v501, 0.0
        %v540 = vmax.f32 %v503, 0.0
        %v541 = vmax.f32 %v507, 0.0
        %v542 = vmax.f32 %v509, 0.0
        %v543 = vld [vmem:[#allocation2] sm:$0xff]
        %v544 = vld [vmem:[#allocation2 + $0x8] sm:$0xff]
        %v545 = vld [vmem:[#allocation2 + $0x10] sm:$0xff]
        %v546 = vld [vmem:[#allocation2 + $0x18] sm:$0xff]
        %v547 = vld [vmem:[#allocation2 + $0x20] sm:$0xff]
        %v548 = vld [vmem:[#allocation2 + $0x28] sm:$0xff]
        %v549 = vld [vmem:[#allocation2 + $0x30] sm:$0xff]
        %v550 = vld [vmem:[#allocation2 + $0x38] sm:$0xff]
        %v551 = vld [vmem:[#allocation2 + $0x40] sm:$0xff]
        %v552 = vld [vmem:[#allocation2 + $0x48] sm:$0xff]
        %v553 = vld [vmem:[#allocation2 + $0x50] sm:$0xff]
        %v554 = vld [vmem:[#allocation2 + $0x58] sm:$0xff]
        %v555 = vld [vmem:[#allocation2 + $0x60] sm:$0xff]
        %v556 = vld [vmem:[#allocation2 + $0x68] sm:$0xff]
        %v557 = vld [vmem:[#allocation2 + $0x70] sm:$0xff]
        %v558 = vld [vmem:[#allocation2 + $0x78] sm:$0xff]
        %v559 = vld [vmem:[#allocation2 + $0x80] sm:$0xff]
        %v560 = vld [vmem:[#allocation2 + $0x88] sm:$0xff]
        %v561 = vld [vmem:[#allocation2 + $0x90] sm:$0xff]
        %v562 = vld [vmem:[#allocation2 + $0x98] sm:$0xff]
        %v563 = vld [vmem:[#allocation2 + $0xa0] sm:$0xff]
        %v564 = vld [vmem:[#allocation2 + $0xa8] sm:$0xff]
        %v565 = vld [vmem:[#allocation2 + $0xb0] sm:$0xff]
        %v566 = vld [vmem:[#allocation2 + $0xb8] sm:$0xff]
        %v567 = vld [vmem:[#allocation2 + $0xc0] sm:$0xff]
        %v568 = vld [vmem:[#allocation2 + $0xc8] sm:$0xff]
        %v569 = vld [vmem:[#allocation2 + $0xd0] sm:$0xff]
        %v570 = vld [vmem:[#allocation2 + $0xd8] sm:$0xff]
        %v571 = vld [vmem:[#allocation2 + $0xe0] sm:$0xff]
        %v572 = vld [vmem:[#allocation2 + $0xe8] sm:$0xff]
        %v573 = vld [vmem:[#allocation2 + $0xf0] sm:$0xff]
        %v574 = vld [vmem:[#allocation2 + $0xf8] sm:$0xff]
        %v575 = vld [vmem:[#allocation2 + $0x100] sm:$0xff]
        %v576 = vld [vmem:[#allocation2 + $0x108] sm:$0xff]
        %v577 = vld [vmem:[#allocation2 + $0x110] sm:$0xff]
        %v578 = vld [vmem:[#allocation2 + $0x118] sm:$0xff]
        %v579 = vld [vmem:[#allocation2 + $0x120] sm:$0xff]
        %v580 = vld [vmem:[#allocation2 + $0x128] sm:$0xff]
        %v581 = vld [vmem:[#allocation2 + $0x130] sm:$0xff]
        %v582 = vld [vmem:[#allocation2 + $0x138] sm:$0xff]
        %v583 = vld [vmem:[#allocation2 + $0x140] sm:$0xff]
        %v584 = vld [vmem:[#allocation2 + $0x148] sm:$0xff]
        %v585 = vld [vmem:[#allocation2 + $0x150] sm:$0xff]
        %v586 = vld [vmem:[#allocation2 + $0x158] sm:$0xff]
        %v587 = vld [vmem:[#allocation2 + $0x160] sm:$0xff]
        %v588 = vld [vmem:[#allocation2 + $0x168] sm:$0xff]
        %v589 = vld [vmem:[#allocation2 + $0x170] sm:$0xff]
        %v590 = vld [vmem:[#allocation2 + $0x178] sm:$0xff]
        %v591 = vld [vmem:[#allocation2 + $0x180] sm:$0xff]
        %v592 = vld [vmem:[#allocation2 + $0x188] sm:$0xff]
        %v593 = vld [vmem:[#allocation2 + $0x190] sm:$0xff]
        %v594 = vld [vmem:[#allocation2 + $0x198] sm:$0xff]
        %v595 = vld [vmem:[#allocation2 + $0x1a0] sm:$0xff]
        %v596 = vld [vmem:[#allocation2 + $0x1a8] sm:$0xff]
        %v597 = vld [vmem:[#allocation2 + $0x1b0] sm:$0xff]
        %v598 = vld [vmem:[#allocation2 + $0x1b8] sm:$0xff]
        %v599 = vld [vmem:[#allocation2 + $0x1c0] sm:$0xff]
        %v600 = vld [vmem:[#allocation2 + $0x1c8] sm:$0xff]
        %v601 = vld [vmem:[#allocation2 + $0x1d0] sm:$0xff]
        %v602 = vld [vmem:[#allocation2 + $0x1d8] sm:$0xff]
        %v603 = vld [vmem:[#allocation2 + $0x1e0] sm:$0xff]
        %v604 = vld [vmem:[#allocation2 + $0x1e8] sm:$0xff]
        %v605 = vld [vmem:[#allocation2 + $0x1f0] sm:$0xff]
        %v606 = vld [vmem:[#allocation2 + $0x1f8] sm:$0xff]
        %v607 = vld [vmem:[#allocation2 + $0x200] sm:$0xff]
        %v608 = vld [vmem:[#allocation2 + $0x208] sm:$0xff]
        %v609 = vld [vmem:[#allocation2 + $0x210] sm:$0xff]
        %v610 = vld [vmem:[#allocation2 + $0x218] sm:$0xff]
        %v611 = vld [vmem:[#allocation2 + $0x220] sm:$0xff]
        %v612 = vld [vmem:[#allocation2 + $0x228] sm:$0xff]
        %v613 = vld [vmem:[#allocation2 + $0x230] sm:$0xff]
        %v614 = vld [vmem:[#allocation2 + $0x238] sm:$0xff]
        %v615 = vld [vmem:[#allocation2 + $0x240] sm:$0xff]
        %v616 = vld [vmem:[#allocation2 + $0x248] sm:$0xff]
        %v617 = vld [vmem:[#allocation2 + $0x250] sm:$0xff]
        %v618 = vld [vmem:[#allocation2 + $0x258] sm:$0xff]
        %v619 = vld [vmem:[#allocation2 + $0x260] sm:$0xff]
        %v620 = vld [vmem:[#allocation2 + $0x268] sm:$0xff]
        %v621 = vld [vmem:[#allocation2 + $0x270] sm:$0xff]
        %v622 = vld [vmem:[#allocation2 + $0x278] sm:$0xff]
        %v623 = vld [vmem:[#allocation2 + $0x280] sm:$0xff]
        %v624 = vld [vmem:[#allocation2 + $0x288] sm:$0xff]
        %v625 = vld [vmem:[#allocation2 + $0x290] sm:$0xff]
        %v626 = vld [vmem:[#allocation2 + $0x298] sm:$0xff]
        %v627 = vld [vmem:[#allocation2 + $0x2a0] sm:$0xff]
        %v628 = vld [vmem:[#allocation2 + $0x2a8] sm:$0xff]
        %v629 = vld [vmem:[#allocation2 + $0x2b0] sm:$0xff]
        %v630 = vld [vmem:[#allocation2 + $0x2b8] sm:$0xff]
        %v631 = vld [vmem:[#allocation2 + $0x2c0] sm:$0xff]
        %v632 = vld [vmem:[#allocation2 + $0x2c8] sm:$0xff]
        %v633 = vld [vmem:[#allocation2 + $0x2d0] sm:$0xff]
        %v634 = vld [vmem:[#allocation2 + $0x2d8] sm:$0xff]
        %v635 = vld [vmem:[#allocation2 + $0x2e0] sm:$0xff]
        %v636 = vld [vmem:[#allocation2 + $0x2e8] sm:$0xff]
        %v637 = vld [vmem:[#allocation2 + $0x2f0] sm:$0xff]
        %v638 = vld [vmem:[#allocation2 + $0x2f8] sm:$0xff]
        %v639 = vld [vmem:[#allocation2 + $0x300] sm:$0xff]
        %v640 = vld [vmem:[#allocation2 + $0x308] sm:$0xff]
        %v641 = vld [vmem:[#allocation2 + $0x310] sm:$0xff]
        %v642 = vld [vmem:[#allocation2 + $0x318] sm:$0xff]
        %v643 = vld [vmem:[#allocation2 + $0x320] sm:$0xff]
        %v644 = vld [vmem:[#allocation2 + $0x328] sm:$0xff]
        %v645 = vld [vmem:[#allocation2 + $0x330] sm:$0xff]
        %v646 = vld [vmem:[#allocation2 + $0x338] sm:$0xff]
        %v647 = vld [vmem:[#allocation2 + $0x340] sm:$0xff]
        %v648 = vld [vmem:[#allocation2 + $0x348] sm:$0xff]
        %v649 = vld [vmem:[#allocation2 + $0x350] sm:$0xff]
        %v650 = vld [vmem:[#allocation2 + $0x358] sm:$0xff]
        %v651 = vld [vmem:[#allocation2 + $0x360] sm:$0xff]
        %v652 = vld [vmem:[#allocation2 + $0x368] sm:$0xff]
        %v653 = vld [vmem:[#allocation2 + $0x370] sm:$0xff]
        %v654 = vld [vmem:[#allocation2 + $0x378] sm:$0xff]
        %v655 = vld [vmem:[#allocation2 + $0x380] sm:$0xff]
        %v656 = vld [vmem:[#allocation2 + $0x388] sm:$0xff]
        %v657 = vld [vmem:[#allocation2 + $0x390] sm:$0xff]
        %v658 = vld [vmem:[#allocation2 + $0x398] sm:$0xff]
        %v659 = vld [vmem:[#allocation2 + $0x3a0] sm:$0xff]
        %v660 = vld [vmem:[#allocation2 + $0x3a8] sm:$0xff]
        %v661 = vld [vmem:[#allocation2 + $0x3b0] sm:$0xff]
        %v662 = vld [vmem:[#allocation2 + $0x3b8] sm:$0xff]
        %v663 = vld [vmem:[#allocation2 + $0x3c0] sm:$0xff]
        %v664 = vld [vmem:[#allocation2 + $0x3c8] sm:$0xff]
        %v665 = vld [vmem:[#allocation2 + $0x3d0] sm:$0xff]
        %v666 = vld [vmem:[#allocation2 + $0x3d8] sm:$0xff]
        %v667 = vld [vmem:[#allocation2 + $0x3e0] sm:$0xff]
        %v668 = vld [vmem:[#allocation2 + $0x3e8] sm:$0xff]
        %v669 = vld [vmem:[#allocation2 + $0x3f0] sm:$0xff]
        %v670 = vld [vmem:[#allocation2 + $0x3f8] sm:$0xff]
        %v672 = vlaneseq
        %v673 = vshrl.u32 %v672, 7
        %v674 = vsub.s32 1, %v673
        %v675 = vrot.slane %v272, %v674
        %v676 = vlaneseq
        %v677 = vshrl.u32 %v676, 7
        %v678 = vsub.s32 5, %v677
        %v679 = vrot.slane %v272, %v678
        %v680 = vlaneseq
        %v681 = vshrl.u32 %v680, 7
        %v682 = vsub.s32 1, %v681
        %v683 = vrot.slane %v273, %v682
        %v684 = vlaneseq
        %v685 = vshrl.u32 %v684, 7
        %v686 = vsub.s32 5, %v685
        %v687 = vrot.slane %v273, %v686
        %v692 = vlaneseq
        %v693 = vshrl.u32 %v692, 7
        %v694 = vsub.s32 1, %v693
        %v695 = vrot.slane %v675, %v694
        %v696 = vlaneseq
        %v697 = vshrl.u32 %v696, 7
        %v698 = vsub.s32 1, %v697
        %v699 = vrot.slane %v679, %v698
        %v700 = vlaneseq
        %v701 = vshrl.u32 %v700, 7
        %v702 = vsub.s32 1, %v701
        %v703 = vrot.slane %v683, %v702
        %v704 = vlaneseq
        %v705 = vshrl.u32 %v704, 7
        %v706 = vsub.s32 1, %v705
        %v707 = vrot.slane %v687, %v706
        %708 = vmatprep.subr.mxu0 %v544
        %709 = vmatpush1.msra.mxu0 %v543
        %710 = vmatprep.subr.mxu0 %v548
        %711 = vmatpush1.msra.mxu0 %v547
        %712 = vmatprep.subr.mxu0 %v552
        %713 = vmatpush1.msra.mxu0 %v551
        %714 = vmatprep.subr.mxu0 %v556
        %715 = vmatpush1.msra.mxu0 %v555
        %716 = vmatprep.subr.mxu0 %v560
        %717 = vmatpush1.msra.mxu0 %v559
        %718 = vmatprep.subr.mxu0 %v564
        %719 = vmatpush1.msra.mxu0 %v563
        %720 = vmatprep.subr.mxu0 %v568
        %721 = vmatpush1.msra.mxu0 %v567
        %722 = vmatprep.subr.mxu0 %v572
        %723 = vmatpush1.msra.mxu0 %v571
        %724 = vmatprep.subr.mxu0 %v576
        %725 = vmatpush1.msra.mxu0 %v575
        %726 = vmatprep.subr.mxu0 %v580
        %727 = vmatpush1.msra.mxu0 %v579
        %728 = vmatprep.subr.mxu0 %v584
        %729 = vmatpush1.msra.mxu0 %v583
        %730 = vmatprep.subr.mxu0 %v588
        %731 = vmatpush1.msra.mxu0 %v587
        %732 = vmatprep.subr.mxu0 %v592
        %733 = vmatpush1.msra.mxu0 %v591
        %734 = vmatprep.subr.mxu0 %v596
        %735 = vmatpush1.msra.mxu0 %v595
        %736 = vmatprep.subr.mxu0 %v600
        %737 = vmatpush1.msra.mxu0 %v599
        %738 = vmatprep.subr.mxu0 %v604
        %739 = vmatpush1.msra.mxu0 %v603
        %740 = vmatprep.subr.mxu0 %v608
        %741 = vmatpush1.msra.mxu0 %v607
        %742 = vmatprep.subr.mxu0 %v612
        %743 = vmatpush1.msra.mxu0 %v611
        %744 = vmatprep.subr.mxu0 %v616
        %745 = vmatpush1.msra.mxu0 %v615
        %746 = vmatprep.subr.mxu0 %v620
        %747 = vmatpush1.msra.mxu0 %v619
        %748 = vmatprep.subr.mxu0 %v624
        %749 = vmatpush1.msra.mxu0 %v623
        %750 = vmatprep.subr.mxu0 %v628
        %751 = vmatpush1.msra.mxu0 %v627
        %752 = vmatprep.subr.mxu0 %v632
        %753 = vmatpush1.msra.mxu0 %v631
        %754 = vmatprep.subr.mxu0 %v636
        %755 = vmatpush1.msra.mxu0 %v635
        %756 = vmatprep.subr.mxu0 %v640
        %757 = vmatpush1.msra.mxu0 %v639
        %758 = vmatprep.subr.mxu0 %v644
        %759 = vmatpush1.msra.mxu0 %v643
        %760 = vmatprep.subr.mxu0 %v648
        %761 = vmatpush1.msra.mxu0 %v647
        %762 = vmatprep.subr.mxu0 %v652
        %763 = vmatpush1.msra.mxu0 %v651
        %764 = vmatprep.subr.mxu0 %v656
        %765 = vmatpush1.msra.mxu0 %v655
        %766 = vmatprep.subr.mxu0 %v660
        %767 = vmatpush1.msra.mxu0 %v659
        %768 = vmatprep.subr.mxu0 %v664
        %769 = vmatpush1.msra.mxu0 %v663
        %770 = vmatprep.subr.mxu0 %v668
        %771 = vmatpush1.msra.mxu0 %v667
        %772 = vmatprep.mubr.f32.mxu0 %v512
        %773 = vmatmul.mubr.f32.gmra.mrb[0].mxu0 %v511
        %v774 = vpop.f32.mrb[0].mxu0
        %v775 = vadd.f32 %v695, %v774
        %v776 = vpop.f32.mrb[0].mxu0
        %v777 = vadd.f32 %v699, %v776
        %778 = vmatprep.mubr.f32.mxu0 %v514
        %779 = vmatmul.mubr.f32.gmra.mrb[0].mxu0 %v513
        %v780 = vpop.f32.mrb[0].mxu0
        %v781 = vadd.f32 %v695, %v780
        %v782 = vpop.f32.mrb[0].mxu0
        %v783 = vadd.f32 %v699, %v782
        %784 = vmatprep.mubr.f32.mxu0 %v516
        %785 = vmatmul.mubr.f32.gmra.mrb[0].mxu0 %v515
        %v786 = vpop.f32.mrb[0].mxu0
        %v787 = vadd.f32 %v695, %v786
        %v788 = vpop.f32.mrb[0].mxu0
        %v789 = vadd.f32 %v699, %v788
        %790 = vmatprep.mubr.f32.mxu0 %v518
        %791 = vmatmul.mubr.f32.gmra.mrb[0].mxu0 %v517
        %v792 = vpop.f32.mrb[0].mxu0
        %v793 = vadd.f32 %v695, %v792
        %v794 = vpop.f32.mrb[0].mxu0
        %v795 = vadd.f32 %v699, %v794
        %796 = vmatprep.mubr.f32.mxu0 %v520
        %797 = vmatmul.mubr.f32.gmra.mrb[0].mxu0 %v519
        %v798 = vpop.f32.mrb[0].mxu0
        %v799 = vadd.f32 %v695, %v798
        %v800 = vpop.f32.mrb[0].mxu0
        %v801 = vadd.f32 %v699, %v800
        %802 = vmatprep.mubr.f32.mxu0 %v522
        %803 = vmatmul.mubr.f32.gmra.mrb[0].mxu0 %v521
        %v804 = vpop.f32.mrb[0].mxu0
        %v805 = vadd.f32 %v695, %v804
        %v806 = vpop.f32.mrb[0].mxu0
        %v807 = vadd.f32 %v699, %v806
        %808 = vmatprep.mubr.f32.mxu0 %v524
        %809 = vmatmul.mubr.f32.gmra.mrb[0].mxu0 %v523
        %v810 = vpop.f32.mrb[0].mxu0
        %v811 = vadd.f32 %v695, %v810
        %v812 = vpop.f32.mrb[0].mxu0
        %v813 = vadd.f32 %v699, %v812
        %814 = vmatprep.mubr.f32.mxu0 %v526
        %815 = vmatmul.mubr.f32.gmra.mrb[0].mxu0 %v525
        %v816 = vpop.f32.mrb[0].mxu0
        %v817 = vadd.f32 %v695, %v816
        %v818 = vpop.f32.mrb[0].mxu0
        %v819 = vadd.f32 %v699, %v818
        %820 = vmatprep.mubr.f32.mxu0 %v528
        %821 = vmatmul.mubr.f32.gmra.mrb[0].mxu0 %v527
        %v822 = vpop.f32.mrb[0].mxu0
        %v823 = vadd.f32 %v695, %v822
        %v824 = vpop.f32.mrb[0].mxu0
        %v825 = vadd.f32 %v699, %v824
        %826 = vmatprep.mubr.f32.mxu0 %v530
        %827 = vmatmul.mubr.f32.gmra.mrb[0].mxu0 %v529
        %v828 = vpop.f32.mrb[0].mxu0
        %v829 = vadd.f32 %v695, %v828
        %v830 = vpop.f32.mrb[0].mxu0
        %v831 = vadd.f32 %v699, %v830
        %832 = vmatprep.mubr.f32.mxu0 %v532
        %833 = vmatmul.mubr.f32.gmra.mrb[0].mxu0 %v531
        %v834 = vpop.f32.mrb[0].mxu0
        %v835 = vadd.f32 %v695, %v834
        %v836 = vpop.f32.mrb[0].mxu0
        %v837 = vadd.f32 %v699, %v836
        %838 = vmatprep.mubr.f32.mxu0 %v534
        %839 = vmatmul.mubr.f32.gmra.mrb[0].mxu0 %v533
        %v840 = vpop.f32.mrb[0].mxu0
        %v841 = vadd.f32 %v695, %v840
        %v842 = vpop.f32.mrb[0].mxu0
        %v843 = vadd.f32 %v699, %v842
        %844 = vmatprep.mubr.f32.mxu0 %v536
        %845 = vmatmul.mubr.f32.gmra.mrb[0].mxu0 %v535
        %v846 = vpop.f32.mrb[0].mxu0
        %v847 = vadd.f32 %v695, %v846
        %v848 = vpop.f32.mrb[0].mxu0
        %v849 = vadd.f32 %v699, %v848
        %850 = vmatprep.mubr.f32.mxu0 %v538
        %851 = vmatmul.mubr.f32.gmra.mrb[0].mxu0 %v537
        %v852 = vpop.f32.mrb[0].mxu0
        %v853 = vadd.f32 %v695, %v852
        %v854 = vpop.f32.mrb[0].mxu0
        %v855 = vadd.f32 %v699, %v854
        %856 = vmatprep.mubr.f32.mxu0 %v540
        %857 = vmatmul.mubr.f32.gmra.mrb[0].mxu0 %v539
        %v858 = vpop.f32.mrb[0].mxu0
        %v859 = vadd.f32 %v695, %v858
        %v860 = vpop.f32.mrb[0].mxu0
        %v861 = vadd.f32 %v699, %v860
        %862 = vmatprep.mubr.f32.mxu0 %v542
        %863 = vmatmul.mubr.f32.gmra.mrb[0].mxu0 %v541
        %v864 = vpop.f32.mrb[0].mxu0
        %v865 = vadd.f32 %v695, %v864
        %v866 = vpop.f32.mrb[0].mxu0
        %v867 = vadd.f32 %v699, %v866
        %868 = vdwg.mxu0
        %869 = vmatprep.subr.mxu0 %v546
        %870 = vmatpush1.msra.mxu0 %v545
        %871 = vmatprep.subr.mxu0 %v550
        %872 = vmatpush1.msra.mxu0 %v549
        %873 = vmatprep.subr.mxu0 %v554
        %874 = vmatpush1.msra.mxu0 %v553
        %875 = vmatprep.subr.mxu0 %v558
        %876 = vmatpush1.msra.mxu0 %v557
        %877 = vmatprep.subr.mxu0 %v562
        %878 = vmatpush1.msra.mxu0 %v561
        %879 = vmatprep.subr.mxu0 %v566
        %880 = vmatpush1.msra.mxu0 %v565
        %881 = vmatprep.subr.mxu0 %v570
        %882 = vmatpush1.msra.mxu0 %v569
        %883 = vmatprep.subr.mxu0 %v574
        %884 = vmatpush1.msra.mxu0 %v573
        %885 = vmatprep.subr.mxu0 %v578
        %886 = vmatpush1.msra.mxu0 %v577
        %887 = vmatprep.subr.mxu0 %v582
        %888 = vmatpush1.msra.mxu0 %v581
        %889 = vmatprep.subr.mxu0 %v586
        %890 = vmatpush1.msra.mxu0 %v585
        %891 = vmatprep.subr.mxu0 %v590
        %892 = vmatpush1.msra.mxu0 %v589
        %893 = vmatprep.subr.mxu0 %v594
        %894 = vmatpush1.msra.mxu0 %v593
        %895 = vmatprep.subr.mxu0 %v598
        %896 = vmatpush1.msra.mxu0 %v597
        %897 = vmatprep.subr.mxu0 %v602
        %898 = vmatpush1.msra.mxu0 %v601
        %899 = vmatprep.subr.mxu0 %v606
        %900 = vmatpush1.msra.mxu0 %v605
        %901 = vmatprep.subr.mxu0 %v610
        %902 = vmatpush1.msra.mxu0 %v609
        %903 = vmatprep.subr.mxu0 %v614
        %904 = vmatpush1.msra.mxu0 %v613
        %905 = vmatprep.subr.mxu0 %v618
        %906 = vmatpush1.msra.mxu0 %v617
        %907 = vmatprep.subr.mxu0 %v622
        %908 = vmatpush1.msra.mxu0 %v621
        %909 = vmatprep.subr.mxu0 %v626
        %910 = vmatpush1.msra.mxu0 %v625
        %911 = vmatprep.subr.mxu0 %v630
        %912 = vmatpush1.msra.mxu0 %v629
        %913 = vmatprep.subr.mxu0 %v634
        %914 = vmatpush1.msra.mxu0 %v633
        %915 = vmatprep.subr.mxu0 %v638
        %916 = vmatpush1.msra.mxu0 %v637
        %917 = vmatprep.subr.mxu0 %v642
        %918 = vmatpush1.msra.mxu0 %v641
        %919 = vmatprep.subr.mxu0 %v646
        %920 = vmatpush1.msra.mxu0 %v645
        %921 = vmatprep.subr.mxu0 %v650
        %922 = vmatpush1.msra.mxu0 %v649
        %923 = vmatprep.subr.mxu0 %v654
        %924 = vmatpush1.msra.mxu0 %v653
        %925 = vmatprep.subr.mxu0 %v658
        %926 = vmatpush1.msra.mxu0 %v657
        %927 = vmatprep.subr.mxu0 %v662
        %928 = vmatpush1.msra.mxu0 %v661
        %929 = vmatprep.subr.mxu0 %v666
        %930 = vmatpush1.msra.mxu0 %v665
        %931 = vmatprep.subr.mxu0 %v670
        %932 = vmatpush1.msra.mxu0 %v669
        %933 = vmatprep.mubr.f32.mxu0 %v512
        %934 = vmatmul.mubr.f32.gmra.mrb[0].mxu0 %v511
        %v935 = vpop.f32.mrb[0].mxu0
        %v936 = vadd.f32 %v703, %v935
        %v937 = vpop.f32.mrb[0].mxu0
        %v938 = vadd.f32 %v707, %v937
        %939 = vmatprep.mubr.f32.mxu0 %v514
        %940 = vmatmul.mubr.f32.gmra.mrb[0].mxu0 %v513
        %v941 = vpop.f32.mrb[0].mxu0
        %v942 = vadd.f32 %v703, %v941
        %v943 = vpop.f32.mrb[0].mxu0
        %v944 = vadd.f32 %v707, %v943
        %945 = vmatprep.mubr.f32.mxu0 %v516
        %946 = vmatmul.mubr.f32.gmra.mrb[0].mxu0 %v515
        %v947 = vpop.f32.mrb[0].mxu0
        %v948 = vadd.f32 %v703, %v947
        %v949 = vpop.f32.mrb[0].mxu0
        %v950 = vadd.f32 %v707, %v949
        %951 = vmatprep.mubr.f32.mxu0 %v518
        %952 = vmatmul.mubr.f32.gmra.mrb[0].mxu0 %v517
        %v953 = vpop.f32.mrb[0].mxu0
        %v954 = vadd.f32 %v703, %v953
        %v955 = vpop.f32.mrb[0].mxu0
        %v956 = vadd.f32 %v707, %v955
        %957 = vmatprep.mubr.f32.mxu0 %v520
        %958 = vmatmul.mubr.f32.gmra.mrb[0].mxu0 %v519
        %v959 = vpop.f32.mrb[0].mxu0
        %v960 = vadd.f32 %v703, %v959
        %v961 = vpop.f32.mrb[0].mxu0
        %v962 = vadd.f32 %v707, %v961
        %963 = vmatprep.mubr.f32.mxu0 %v522
        %964 = vmatmul.mubr.f32.gmra.mrb[0].mxu0 %v521
        %v965 = vpop.f32.mrb[0].mxu0
        %v966 = vadd.f32 %v703, %v965
        %v967 = vpop.f32.mrb[0].mxu0
        %v968 = vadd.f32 %v707, %v967
        %969 = vmatprep.mubr.f32.mxu0 %v524
        %970 = vmatmul.mubr.f32.gmra.mrb[0].mxu0 %v523
        %v971 = vpop.f32.mrb[0].mxu0
        %v972 = vadd.f32 %v703, %v971
        %v973 = vpop.f32.mrb[0].mxu0
        %v974 = vadd.f32 %v707, %v973
        %975 = vmatprep.mubr.f32.mxu0 %v526
        %976 = vmatmul.mubr.f32.gmra.mrb[0].mxu0 %v525
        %v977 = vpop.f32.mrb[0].mxu0
        %v978 = vadd.f32 %v703, %v977
        %v979 = vpop.f32.mrb[0].mxu0
        %v980 = vadd.f32 %v707, %v979
        %981 = vmatprep.mubr.f32.mxu0 %v528
        %982 = vmatmul.mubr.f32.gmra.mrb[0].mxu0 %v527
        %v983 = vpop.f32.mrb[0].mxu0
        %v984 = vadd.f32 %v703, %v983
        %v985 = vpop.f32.mrb[0].mxu0
        %v986 = vadd.f32 %v707, %v985
        %987 = vmatprep.mubr.f32.mxu0 %v530
        %988 = vmatmul.mubr.f32.gmra.mrb[0].mxu0 %v529
        %v989 = vpop.f32.mrb[0].mxu0
        %v990 = vadd.f32 %v703, %v989
        %v991 = vpop.f32.mrb[0].mxu0
        %v992 = vadd.f32 %v707, %v991
        %993 = vmatprep.mubr.f32.mxu0 %v532
        %994 = vmatmul.mubr.f32.gmra.mrb[0].mxu0 %v531
        %v995 = vpop.f32.mrb[0].mxu0
        %v996 = vadd.f32 %v703, %v995
        %v997 = vpop.f32.mrb[0].mxu0
        %v998 = vadd.f32 %v707, %v997
        %999 = vmatprep.mubr.f32.mxu0 %v534
        %1000 = vmatmul.mubr.f32.gmra.mrb[0].mxu0 %v533
        %v1001 = vpop.f32.mrb[0].mxu0
        %v1002 = vadd.f32 %v703, %v1001
        %v1003 = vpop.f32.mrb[0].mxu0
        %v1004 = vadd.f32 %v707, %v1003
        %1005 = vmatprep.mubr.f32.mxu0 %v536
        %1006 = vmatmul.mubr.f32.gmra.mrb[0].mxu0 %v535
        %v1007 = vpop.f32.mrb[0].mxu0
        %v1008 = vadd.f32 %v703, %v1007
        %v1009 = vpop.f32.mrb[0].mxu0
        %v1010 = vadd.f32 %v707, %v1009
        %1011 = vmatprep.mubr.f32.mxu0 %v538
        %1012 = vmatmul.mubr.f32.gmra.mrb[0].mxu0 %v537
        %v1013 = vpop.f32.mrb[0].mxu0
        %v1014 = vadd.f32 %v703, %v1013
        %v1015 = vpop.f32.mrb[0].mxu0
        %v1016 = vadd.f32 %v707, %v1015
        %1017 = vmatprep.mubr.f32.mxu0 %v540
        %1018 = vmatmul.mubr.f32.gmra.mrb[0].mxu0 %v539
        %v1019 = vpop.f32.mrb[0].mxu0
        %v1020 = vadd.f32 %v703, %v1019
        %v1021 = vpop.f32.mrb[0].mxu0
        %v1022 = vadd.f32 %v707, %v1021
        %1023 = vmatprep.mubr.f32.mxu0 %v542
        %1024 = vmatmul.mubr.f32.gmra.mrb[0].mxu0 %v541
        %v1025 = vpop.f32.mrb[0].mxu0
        %v1026 = vadd.f32 %v703, %v1025
        %v1027 = vpop.f32.mrb[0].mxu0
        %v1028 = vadd.f32 %v707, %v1027
        %1029 = vdwg.mxu0
        %v1030 = vmax.f32 %v775, 0.0
        %v1031 = vmax.f32 %v777, 0.0
        %v1032 = vmax.f32 %v936, 0.0
        %v1033 = vmax.f32 %v938, 0.0
        %v1034 = vmax.f32 %v781, 0.0
        %v1035 = vmax.f32 %v783, 0.0
        %v1036 = vmax.f32 %v942, 0.0
        %v1037 = vmax.f32 %v944, 0.0
        %v1038 = vmax.f32 %v787, 0.0
        %v1039 = vmax.f32 %v789, 0.0
        %v1040 = vmax.f32 %v948, 0.0
        %v1041 = vmax.f32 %v950, 0.0
        %v1042 = vmax.f32 %v793, 0.0
        %v1043 = vmax.f32 %v795, 0.0
        %v1044 = vmax.f32 %v954, 0.0
        %v1045 = vmax.f32 %v956, 0.0
        %v1046 = vmax.f32 %v799, 0.0
        %v1047 = vmax.f32 %v801, 0.0
        %v1048 = vmax.f32 %v960, 0.0
        %v1049 = vmax.f32 %v962, 0.0
        %v1050 = vmax.f32 %v805, 0.0
        %v1051 = vmax.f32 %v807, 0.0
        %v1052 = vmax.f32 %v966, 0.0
        %v1053 = vmax.f32 %v968, 0.0
        %v1054 = vmax.f32 %v811, 0.0
        %v1055 = vmax.f32 %v813, 0.0
        %v1056 = vmax.f32 %v972, 0.0
        %v1057 = vmax.f32 %v974, 0.0
        %v1058 = vmax.f32 %v817, 0.0
        %v1059 = vmax.f32 %v819, 0.0
        %v1060 = vmax.f32 %v978, 0.0
        %v1061 = vmax.f32 %v980, 0.0
        %v1062 = vmax.f32 %v823, 0.0
        %v1063 = vmax.f32 %v825, 0.0
        %v1064 = vmax.f32 %v984, 0.0
        %v1065 = vmax.f32 %v986, 0.0
        %v1066 = vmax.f32 %v829, 0.0
        %v1067 = vmax.f32 %v831, 0.0
        %v1068 = vmax.f32 %v990, 0.0
        %v1069 = vmax.f32 %v992, 0.0
        %v1070 = vmax.f32 %v835, 0.0
        %v1071 = vmax.f32 %v837, 0.0
        %v1072 = vmax.f32 %v996, 0.0
        %v1073 = vmax.f32 %v998, 0.0
        %v1074 = vmax.f32 %v841, 0.0
        %v1075 = vmax.f32 %v843, 0.0
        %v1076 = vmax.f32 %v1002, 0.0
        %v1077 = vmax.f32 %v1004, 0.0
        %v1078 = vmax.f32 %v847, 0.0
        %v1079 = vmax.f32 %v849, 0.0
        %v1080 = vmax.f32 %v1008, 0.0
        %v1081 = vmax.f32 %v1010, 0.0
        %v1082 = vmax.f32 %v853, 0.0
        %v1083 = vmax.f32 %v855, 0.0
        %v1084 = vmax.f32 %v1014, 0.0
        %v1085 = vmax.f32 %v1016, 0.0
        %v1086 = vmax.f32 %v859, 0.0
        %v1087 = vmax.f32 %v861, 0.0
        %v1088 = vmax.f32 %v1020, 0.0
        %v1089 = vmax.f32 %v1022, 0.0
        %v1090 = vmax.f32 %v865, 0.0
        %v1091 = vmax.f32 %v867, 0.0
        %v1092 = vmax.f32 %v1026, 0.0
        %v1093 = vmax.f32 %v1028, 0.0
        %v1094 = vld [vmem:[#allocation5] sm:$0xff]
        %v1095 = vld [vmem:[#allocation5 + $0x8] sm:$0xff]
        %v1096 = vld [vmem:[#allocation5 + $0x10] sm:$0xff]
        %v1097 = vld [vmem:[#allocation5 + $0x18] sm:$0xff]
        %v1098 = vld [vmem:[#allocation5 + $0x20] sm:$0xff]
        %v1099 = vld [vmem:[#allocation5 + $0x28] sm:$0xff]
        %v1100 = vld [vmem:[#allocation5 + $0x30] sm:$0xff]
        %v1101 = vld [vmem:[#allocation5 + $0x38] sm:$0xff]
        %v1102 = vld [vmem:[#allocation5 + $0x40] sm:$0xff]
        %v1103 = vld [vmem:[#allocation5 + $0x48] sm:$0xff]
        %v1104 = vld [vmem:[#allocation5 + $0x50] sm:$0xff]
        %v1105 = vld [vmem:[#allocation5 + $0x58] sm:$0xff]
        %v1106 = vld [vmem:[#allocation5 + $0x60] sm:$0xff]
        %v1107 = vld [vmem:[#allocation5 + $0x68] sm:$0xff]
        %v1108 = vld [vmem:[#allocation5 + $0x70] sm:$0xff]
        %v1109 = vld [vmem:[#allocation5 + $0x78] sm:$0xff]
        %v1110 = vld [vmem:[#allocation5 + $0x80] sm:$0xff]
        %v1111 = vld [vmem:[#allocation5 + $0x88] sm:$0xff]
        %v1112 = vld [vmem:[#allocation5 + $0x90] sm:$0xff]
        %v1113 = vld [vmem:[#allocation5 + $0x98] sm:$0xff]
        %v1114 = vld [vmem:[#allocation5 + $0xa0] sm:$0xff]
        %v1115 = vld [vmem:[#allocation5 + $0xa8] sm:$0xff]
        %v1116 = vld [vmem:[#allocation5 + $0xb0] sm:$0xff]
        %v1117 = vld [vmem:[#allocation5 + $0xb8] sm:$0xff]
        %v1118 = vld [vmem:[#allocation5 + $0xc0] sm:$0xff]
        %v1119 = vld [vmem:[#allocation5 + $0xc8] sm:$0xff]
        %v1120 = vld [vmem:[#allocation5 + $0xd0] sm:$0xff]
        %v1121 = vld [vmem:[#allocation5 + $0xd8] sm:$0xff]
        %v1122 = vld [vmem:[#allocation5 + $0xe0] sm:$0xff]
        %v1123 = vld [vmem:[#allocation5 + $0xe8] sm:$0xff]
        %v1124 = vld [vmem:[#allocation5 + $0xf0] sm:$0xff]
        %v1125 = vld [vmem:[#allocation5 + $0xf8] sm:$0xff]
        %v1126 = vld [vmem:[#allocation5 + $0x100] sm:$0xff]
        %v1127 = vld [vmem:[#allocation5 + $0x108] sm:$0xff]
        %v1128 = vld [vmem:[#allocation5 + $0x110] sm:$0xff]
        %v1129 = vld [vmem:[#allocation5 + $0x118] sm:$0xff]
        %v1130 = vld [vmem:[#allocation5 + $0x120] sm:$0xff]
        %v1131 = vld [vmem:[#allocation5 + $0x128] sm:$0xff]
        %v1132 = vld [vmem:[#allocation5 + $0x130] sm:$0xff]
        %v1133 = vld [vmem:[#allocation5 + $0x138] sm:$0xff]
        %v1134 = vld [vmem:[#allocation5 + $0x140] sm:$0xff]
        %v1135 = vld [vmem:[#allocation5 + $0x148] sm:$0xff]
        %v1136 = vld [vmem:[#allocation5 + $0x150] sm:$0xff]
        %v1137 = vld [vmem:[#allocation5 + $0x158] sm:$0xff]
        %v1138 = vld [vmem:[#allocation5 + $0x160] sm:$0xff]
        %v1139 = vld [vmem:[#allocation5 + $0x168] sm:$0xff]
        %v1140 = vld [vmem:[#allocation5 + $0x170] sm:$0xff]
        %v1141 = vld [vmem:[#allocation5 + $0x178] sm:$0xff]
        %v1142 = vld [vmem:[#allocation5 + $0x180] sm:$0xff]
        %v1143 = vld [vmem:[#allocation5 + $0x188] sm:$0xff]
        %v1144 = vld [vmem:[#allocation5 + $0x190] sm:$0xff]
        %v1145 = vld [vmem:[#allocation5 + $0x198] sm:$0xff]
        %v1146 = vld [vmem:[#allocation5 + $0x1a0] sm:$0xff]
        %v1147 = vld [vmem:[#allocation5 + $0x1a8] sm:$0xff]
        %v1148 = vld [vmem:[#allocation5 + $0x1b0] sm:$0xff]
        %v1149 = vld [vmem:[#allocation5 + $0x1b8] sm:$0xff]
        %v1150 = vld [vmem:[#allocation5 + $0x1c0] sm:$0xff]
        %v1151 = vld [vmem:[#allocation5 + $0x1c8] sm:$0xff]
        %v1152 = vld [vmem:[#allocation5 + $0x1d0] sm:$0xff]
        %v1153 = vld [vmem:[#allocation5 + $0x1d8] sm:$0xff]
        %v1154 = vld [vmem:[#allocation5 + $0x1e0] sm:$0xff]
        %v1155 = vld [vmem:[#allocation5 + $0x1e8] sm:$0xff]
        %v1156 = vld [vmem:[#allocation5 + $0x1f0] sm:$0xff]
        %v1157 = vld [vmem:[#allocation5 + $0x1f8] sm:$0xff]
        %v1158 = vlaneseq
        %v1159 = vshrl.u32 %v1158, 7
        %v1160 = vsub.s32 2, %v1159
        %v1161 = vrot.slane %v272, %v1160
        %1162 = vmatprep.subr.mxu0 0.0
        %1163 = vmatpush1.msra.mxu0 %v1094
        %1164 = vmatprep.subr.mxu0 0.0
        %1165 = vmatpush1.msra.mxu0 %v1095
        %1166 = vmatprep.subr.mxu0 0.0
        %1167 = vmatpush1.msra.mxu0 %v1096
        %1168 = vmatprep.subr.mxu0 0.0
        %1169 = vmatpush1.msra.mxu0 %v1097
        %1170 = vmatprep.subr.mxu0 0.0
        %1171 = vmatpush1.msra.mxu0 %v1098
        %1172 = vmatprep.subr.mxu0 0.0
        %1173 = vmatpush1.msra.mxu0 %v1099
        %1174 = vmatprep.subr.mxu0 0.0
        %1175 = vmatpush1.msra.mxu0 %v1100
        %1176 = vmatprep.subr.mxu0 0.0
        %1177 = vmatpush1.msra.mxu0 %v1101
        %1178 = vmatprep.subr.mxu0 0.0
        %1179 = vmatpush1.msra.mxu0 %v1102
        %1180 = vmatprep.subr.mxu0 0.0
        %1181 = vmatpush1.msra.mxu0 %v1103
        %1182 = vmatprep.subr.mxu0 0.0
        %1183 = vmatpush1.msra.mxu0 %v1104
        %1184 = vmatprep.subr.mxu0 0.0
        %1185 = vmatpush1.msra.mxu0 %v1105
        %1186 = vmatprep.subr.mxu0 0.0
        %1187 = vmatpush1.msra.mxu0 %v1106
        %1188 = vmatprep.subr.mxu0 0.0
        %1189 = vmatpush1.msra.mxu0 %v1107
        %1190 = vmatprep.subr.mxu0 0.0
        %1191 = vmatpush1.msra.mxu0 %v1108
        %1192 = vmatprep.subr.mxu0 0.0
        %1193 = vmatpush1.msra.mxu0 %v1109
        %1194 = vmatprep.subr.mxu0 0.0
        %1195 = vmatpush1.msra.mxu0 %v1110
        %1196 = vmatprep.subr.mxu0 0.0
        %1197 = vmatpush1.msra.mxu0 %v1111
        %1198 = vmatprep.subr.mxu0 0.0
        %1199 = vmatpush1.msra.mxu0 %v1112
        %1200 = vmatprep.subr.mxu0 0.0
        %1201 = vmatpush1.msra.mxu0 %v1113
        %1202 = vmatprep.subr.mxu0 0.0
        %1203 = vmatpush1.msra.mxu0 %v1114
        %1204 = vmatprep.subr.mxu0 0.0
        %1205 = vmatpush1.msra.mxu0 %v1115
        %1206 = vmatprep.subr.mxu0 0.0
        %1207 = vmatpush1.msra.mxu0 %v1116
        %1208 = vmatprep.subr.mxu0 0.0
        %1209 = vmatpush1.msra.mxu0 %v1117
        %1210 = vmatprep.subr.mxu0 0.0
        %1211 = vmatpush1.msra.mxu0 %v1118
        %1212 = vmatprep.subr.mxu0 0.0
        %1213 = vmatpush1.msra.mxu0 %v1119
        %1214 = vmatprep.subr.mxu0 0.0
        %1215 = vmatpush1.msra.mxu0 %v1120
        %1216 = vmatprep.subr.mxu0 0.0
        %1217 = vmatpush1.msra.mxu0 %v1121
        %1218 = vmatprep.subr.mxu0 0.0
        %1219 = vmatpush1.msra.mxu0 %v1122
        %1220 = vmatprep.subr.mxu0 0.0
        %1221 = vmatpush1.msra.mxu0 %v1123
        %1222 = vmatprep.subr.mxu0 0.0
        %1223 = vmatpush1.msra.mxu0 %v1124
        %1224 = vmatprep.subr.mxu0 0.0
        %1225 = vmatpush1.msra.mxu0 %v1125
        %1226 = vmatprep.mubr.f32.mxu0 %v1031
        %1227 = vmatmul.mubr.f32.gmra.mrb[0].mxu0 %v1030
        %v1228 = vpop.f32.mrb[0].mxu0
        %v1229 = vadd.f32 %v1161, %v1228
        %v1230 = vpop.f32.mrb[0].mxu0
        %1231 = vmatprep.mubr.f32.mxu0 %v1035
        %1232 = vmatmul.mubr.f32.gmra.mrb[0].mxu0 %v1034
        %v1233 = vpop.f32.mrb[0].mxu0
        %v1234 = vadd.f32 %v1161, %v1233
        %v1235 = vpop.f32.mrb[0].mxu0
        %1236 = vmatprep.mubr.f32.mxu0 %v1039
        %1237 = vmatmul.mubr.f32.gmra.mrb[0].mxu0 %v1038
        %v1238 = vpop.f32.mrb[0].mxu0
        %v1239 = vadd.f32 %v1161, %v1238
        %v1240 = vpop.f32.mrb[0].mxu0
        %1241 = vmatprep.mubr.f32.mxu0 %v1043
        %1242 = vmatmul.mubr.f32.gmra.mrb[0].mxu0 %v1042
        %v1243 = vpop.f32.mrb[0].mxu0
        %v1244 = vadd.f32 %v1161, %v1243
        %v1245 = vpop.f32.mrb[0].mxu0
        %1246 = vmatprep.mubr.f32.mxu0 %v1047
        %1247 = vmatmul.mubr.f32.gmra.mrb[0].mxu0 %v1046
        %v1248 = vpop.f32.mrb[0].mxu0
        %v1249 = vadd.f32 %v1161, %v1248
        %v1250 = vpop.f32.mrb[0].mxu0
        %1251 = vmatprep.mubr.f32.mxu0 %v1051
        %1252 = vmatmul.mubr.f32.gmra.mrb[0].mxu0 %v1050
        %v1253 = vpop.f32.mrb[0].mxu0
        %v1254 = vadd.f32 %v1161, %v1253
        %v1255 = vpop.f32.mrb[0].mxu0
        %1256 = vmatprep.mubr.f32.mxu0 %v1055
        %1257 = vmatmul.mubr.f32.gmra.mrb[0].mxu0 %v1054
        %v1258 = vpop.f32.mrb[0].mxu0
        %v1259 = vadd.f32 %v1161, %v1258
        %v1260 = vpop.f32.mrb[0].mxu0
        %1261 = vmatprep.mubr.f32.mxu0 %v1059
        %1262 = vmatmul.mubr.f32.gmra.mrb[0].mxu0 %v1058
        %v1263 = vpop.f32.mrb[0].mxu0
        %v1264 = vadd.f32 %v1161, %v1263
        %v1265 = vpop.f32.mrb[0].mxu0
        %1266 = vmatprep.mubr.f32.mxu0 %v1063
        %1267 = vmatmul.mubr.f32.gmra.mrb[0].mxu0 %v1062
        %v1268 = vpop.f32.mrb[0].mxu0
        %v1269 = vadd.f32 %v1161, %v1268
        %v1270 = vpop.f32.mrb[0].mxu0
        %1271 = vmatprep.mubr.f32.mxu0 %v1067
        %1272 = vmatmul.mubr.f32.gmra.mrb[0].mxu0 %v1066
        %v1273 = vpop.f32.mrb[0].mxu0
        %v1274 = vadd.f32 %v1161, %v1273
        %v1275 = vpop.f32.mrb[0].mxu0
        %1276 = vmatprep.mubr.f32.mxu0 %v1071
        %1277 = vmatmul.mubr.f32.gmra.mrb[0].mxu0 %v1070
        %v1278 = vpop.f32.mrb[0].mxu0
        %v1279 = vadd.f32 %v1161, %v1278
        %v1280 = vpop.f32.mrb[0].mxu0
        %1281 = vmatprep.mubr.f32.mxu0 %v1075
        %1282 = vmatmul.mubr.f32.gmra.mrb[0].mxu0 %v1074
        %v1283 = vpop.f32.mrb[0].mxu0
        %v1284 = vadd.f32 %v1161, %v1283
        %v1285 = vpop.f32.mrb[0].mxu0
        %1286 = vmatprep.mubr.f32.mxu0 %v1079
        %1287 = vmatmul.mubr.f32.gmra.mrb[0].mxu0 %v1078
        %v1288 = vpop.f32.mrb[0].mxu0
        %v1289 = vadd.f32 %v1161, %v1288
        %v1290 = vpop.f32.mrb[0].mxu0
        %1291 = vmatprep.mubr.f32.mxu0 %v1083
        %1292 = vmatmul.mubr.f32.gmra.mrb[0].mxu0 %v1082
        %v1293 = vpop.f32.mrb[0].mxu0
        %v1294 = vadd.f32 %v1161, %v1293
        %v1295 = vpop.f32.mrb[0].mxu0
        %1296 = vmatprep.mubr.f32.mxu0 %v1087
        %1297 = vmatmul.mubr.f32.gmra.mrb[0].mxu0 %v1086
        %v1298 = vpop.f32.mrb[0].mxu0
        %v1299 = vadd.f32 %v1161, %v1298
        %v1300 = vpop.f32.mrb[0].mxu0
        %1301 = vmatprep.mubr.f32.mxu0 %v1091
        %1302 = vmatmul.mubr.f32.gmra.mrb[0].mxu0 %v1090
        %v1303 = vpop.f32.mrb[0].mxu0
        %v1304 = vadd.f32 %v1161, %v1303
        %v1305 = vpop.f32.mrb[0].mxu0
        %1306 = vdwg.mxu0
        %1307 = vmatprep.subr.mxu0 0.0
        %1308 = vmatpush1.msra.mxu0 %v1126
        %1309 = vmatprep.subr.mxu0 0.0
        %1310 = vmatpush1.msra.mxu0 %v1127
        %1311 = vmatprep.subr.mxu0 0.0
        %1312 = vmatpush1.msra.mxu0 %v1128
        %1313 = vmatprep.subr.mxu0 0.0
        %1314 = vmatpush1.msra.mxu0 %v1129
        %1315 = vmatprep.subr.mxu0 0.0
        %1316 = vmatpush1.msra.mxu0 %v1130
        %1317 = vmatprep.subr.mxu0 0.0
        %1318 = vmatpush1.msra.mxu0 %v1131
        %1319 = vmatprep.subr.mxu0 0.0
        %1320 = vmatpush1.msra.mxu0 %v1132
        %1321 = vmatprep.subr.mxu0 0.0
        %1322 = vmatpush1.msra.mxu0 %v1133
        %1323 = vmatprep.subr.mxu0 0.0
        %1324 = vmatpush1.msra.mxu0 %v1134
        %1325 = vmatprep.subr.mxu0 0.0
        %1326 = vmatpush1.msra.mxu0 %v1135
        %1327 = vmatprep.subr.mxu0 0.0
        %1328 = vmatpush1.msra.mxu0 %v1136
        %1329 = vmatprep.subr.mxu0 0.0
        %1330 = vmatpush1.msra.mxu0 %v1137
        %1331 = vmatprep.subr.mxu0 0.0
        %1332 = vmatpush1.msra.mxu0 %v1138
        %1333 = vmatprep.subr.mxu0 0.0
        %1334 = vmatpush1.msra.mxu0 %v1139
        %1335 = vmatprep.subr.mxu0 0.0
        %1336 = vmatpush1.msra.mxu0 %v1140
        %1337 = vmatprep.subr.mxu0 0.0
        %1338 = vmatpush1.msra.mxu0 %v1141
        %1339 = vmatprep.subr.mxu0 0.0
        %1340 = vmatpush1.msra.mxu0 %v1142
        %1341 = vmatprep.subr.mxu0 0.0
        %1342 = vmatpush1.msra.mxu0 %v1143
        %1343 = vmatprep.subr.mxu0 0.0
        %1344 = vmatpush1.msra.mxu0 %v1144
        %1345 = vmatprep.subr.mxu0 0.0
        %1346 = vmatpush1.msra.mxu0 %v1145
        %1347 = vmatprep.subr.mxu0 0.0
        %1348 = vmatpush1.msra.mxu0 %v1146
        %1349 = vmatprep.subr.mxu0 0.0
        %1350 = vmatpush1.msra.mxu0 %v1147
        %1351 = vmatprep.subr.mxu0 0.0
        %1352 = vmatpush1.msra.mxu0 %v1148
        %1353 = vmatprep.subr.mxu0 0.0
        %1354 = vmatpush1.msra.mxu0 %v1149
        %1355 = vmatprep.subr.mxu0 0.0
        %1356 = vmatpush1.msra.mxu0 %v1150
        %1357 = vmatprep.subr.mxu0 0.0
        %1358 = vmatpush1.msra.mxu0 %v1151
        %1359 = vmatprep.subr.mxu0 0.0
        %1360 = vmatpush1.msra.mxu0 %v1152
        %1361 = vmatprep.subr.mxu0 0.0
        %1362 = vmatpush1.msra.mxu0 %v1153
        %1363 = vmatprep.subr.mxu0 0.0
        %1364 = vmatpush1.msra.mxu0 %v1154
        %1365 = vmatprep.subr.mxu0 0.0
        %1366 = vmatpush1.msra.mxu0 %v1155
        %1367 = vmatprep.subr.mxu0 0.0
        %1368 = vmatpush1.msra.mxu0 %v1156
        %1369 = vmatprep.subr.mxu0 0.0
        %1370 = vmatpush1.msra.mxu0 %v1157
        %1371 = vmatprep.mubr.f32.mxu0 %v1033
        %1372 = vmatmul.mubr.f32.gmra.mrb[0].mxu0 %v1032
        %v1373 = vpop.f32.mrb[0].mxu0
        %v1374 = vadd.f32 %v1229, %v1373
        %v1375 = vpop.f32.mrb[0].mxu0
        %1376 = vmatprep.mubr.f32.mxu0 %v1037
        %1377 = vmatmul.mubr.f32.gmra.mrb[0].mxu0 %v1036
        %v1378 = vpop.f32.mrb[0].mxu0
        %v1379 = vadd.f32 %v1234, %v1378
        %v1380 = vpop.f32.mrb[0].mxu0
        %1381 = vmatprep.mubr.f32.mxu0 %v1041
        %1382 = vmatmul.mubr.f32.gmra.mrb[0].mxu0 %v1040
        %v1383 = vpop.f32.mrb[0].mxu0
        %v1384 = vadd.f32 %v1239, %v1383
        %v1385 = vpop.f32.mrb[0].mxu0
        %1386 = vmatprep.mubr.f32.mxu0 %v1045
        %1387 = vmatmul.mubr.f32.gmra.mrb[0].mxu0 %v1044
        %v1388 = vpop.f32.mrb[0].mxu0
        %v1389 = vadd.f32 %v1244, %v1388
        %v1390 = vpop.f32.mrb[0].mxu0
        %1391 = vmatprep.mubr.f32.mxu0 %v1049
        %1392 = vmatmul.mubr.f32.gmra.mrb[0].mxu0 %v1048
        %v1393 = vpop.f32.mrb[0].mxu0
        %v1394 = vadd.f32 %v1249, %v1393
        %v1395 = vpop.f32.mrb[0].mxu0
        %1396 = vmatprep.mubr.f32.mxu0 %v1053
        %1397 = vmatmul.mubr.f32.gmra.mrb[0].mxu0 %v1052
        %v1398 = vpop.f32.mrb[0].mxu0
        %v1399 = vadd.f32 %v1254, %v1398
        %v1400 = vpop.f32.mrb[0].mxu0
        %1401 = vmatprep.mubr.f32.mxu0 %v1057
        %1402 = vmatmul.mubr.f32.gmra.mrb[0].mxu0 %v1056
        %v1403 = vpop.f32.mrb[0].mxu0
        %v1404 = vadd.f32 %v1259, %v1403
        %v1405 = vpop.f32.mrb[0].mxu0
        %1406 = vmatprep.mubr.f32.mxu0 %v1061
        %1407 = vmatmul.mubr.f32.gmra.mrb[0].mxu0 %v1060
        %v1408 = vpop.f32.mrb[0].mxu0
        %v1409 = vadd.f32 %v1264, %v1408
        %v1410 = vpop.f32.mrb[0].mxu0
        %1411 = vmatprep.mubr.f32.mxu0 %v1065
        %1412 = vmatmul.mubr.f32.gmra.mrb[0].mxu0 %v1064
        %v1413 = vpop.f32.mrb[0].mxu0
        %v1414 = vadd.f32 %v1269, %v1413
        %v1415 = vpop.f32.mrb[0].mxu0
        %1416 = vmatprep.mubr.f32.mxu0 %v1069
        %1417 = vmatmul.mubr.f32.gmra.mrb[0].mxu0 %v1068
        %v1418 = vpop.f32.mrb[0].mxu0
        %v1419 = vadd.f32 %v1274, %v1418
        %v1420 = vpop.f32.mrb[0].mxu0
        %1421 = vmatprep.mubr.f32.mxu0 %v1073
        %1422 = vmatmul.mubr.f32.gmra.mrb[0].mxu0 %v1072
        %v1423 = vpop.f32.mrb[0].mxu0
        %v1424 = vadd.f32 %v1279, %v1423
        %v1425 = vpop.f32.mrb[0].mxu0
        %1426 = vmatprep.mubr.f32.mxu0 %v1077
        %1427 = vmatmul.mubr.f32.gmra.mrb[0].mxu0 %v1076
        %v1428 = vpop.f32.mrb[0].mxu0
        %v1429 = vadd.f32 %v1284, %v1428
        %v1430 = vpop.f32.mrb[0].mxu0
        %1431 = vmatprep.mubr.f32.mxu0 %v1081
        %1432 = vmatmul.mubr.f32.gmra.mrb[0].mxu0 %v1080
        %v1433 = vpop.f32.mrb[0].mxu0
        %v1434 = vadd.f32 %v1289, %v1433
        %v1435 = vpop.f32.mrb[0].mxu0
        %1436 = vmatprep.mubr.f32.mxu0 %v1085
        %1437 = vmatmul.mubr.f32.gmra.mrb[0].mxu0 %v1084
        %v1438 = vpop.f32.mrb[0].mxu0
        %v1439 = vadd.f32 %v1294, %v1438
        %v1440 = vpop.f32.mrb[0].mxu0
        %1441 = vmatprep.mubr.f32.mxu0 %v1089
        %1442 = vmatmul.mubr.f32.gmra.mrb[0].mxu0 %v1088
        %v1443 = vpop.f32.mrb[0].mxu0
        %v1444 = vadd.f32 %v1299, %v1443
        %v1445 = vpop.f32.mrb[0].mxu0
        %1446 = vmatprep.mubr.f32.mxu0 %v1093
        %1447 = vmatmul.mubr.f32.gmra.mrb[0].mxu0 %v1092
        %v1448 = vpop.f32.mrb[0].mxu0
        %v1449 = vadd.f32 %v1304, %v1448
        %v1450 = vpop.f32.mrb[0].mxu0
        %1451 = vdwg.mxu0
        %1452 = vst [vmem:[%s248] sm:$0xff] %v1374
        %1453 = vst [vmem:[%s248 + $0x8] sm:$0xff] %v1379
        %1454 = vst [vmem:[%s248 + $0x10] sm:$0xff] %v1384
        %1455 = vst [vmem:[%s248 + $0x18] sm:$0xff] %v1389
        %1456 = vst [vmem:[%s248 + $0x20] sm:$0xff] %v1394
        %1457 = vst [vmem:[%s248 + $0x28] sm:$0xff] %v1399
        %1458 = vst [vmem:[%s248 + $0x30] sm:$0xff] %v1404
        %1459 = vst [vmem:[%s248 + $0x38] sm:$0xff] %v1409
        %1460 = vst [vmem:[%s248 + $0x40] sm:$0xff] %v1414
        %1461 = vst [vmem:[%s248 + $0x48] sm:$0xff] %v1419
        %1462 = vst [vmem:[%s248 + $0x50] sm:$0xff] %v1424
        %1463 = vst [vmem:[%s248 + $0x58] sm:$0xff] %v1429
        %1464 = vst [vmem:[%s248 + $0x60] sm:$0xff] %v1434
        %1465 = vst [vmem:[%s248 + $0x68] sm:$0xff] %v1439
        %1466 = vst [vmem:[%s248 + $0x70] sm:$0xff] %v1444
        %1467 = vst [vmem:[%s248 + $0x78] sm:$0xff] %v1449
        %s1468 = sand.u32 %s139, 1
        %s1469 = scalar_lea.sflag [#allocation4], %s1468
        %s1470 = sand.u32 %s139, 1
        %s1471 = smul.addr %s1470, 128
        %s1472 = scalar_lea.vmem [#allocation7], %s1471
        // Predicated region
        $region49: #{tpu_custom_call.1} parent=39 // pred_check
          %p1473 = pneg %p149
        $region50: #{tpu_custom_call.1} parent=39 // pred_check_branch
          %1475 = sbr.rel (%p1473) target = $region52
        $region51: #{tpu_custom_call.1} parent=39 // pred_region
          %s1476 = smul.u32 16, %s21
          %s1478 = ssub.s32 2048, 2048
          %1479 = vsyncadd %s1469, %s1478
          %s1480 = smul.addr %s1476, 128
          %s1481 = scalar_lea.hbm %s5, %s1480
          %s1482 = sshll.u32 %s1472, 4
          %s1483 = int_to_ptr.vmem [resolvable:$true] %s1482
          %1488 = dma.vmem_to_hbm [thread:$0]  %s1483, 2048, %s1481, %s1469, 128, 128, 8
        $region52: #{tpu_custom_call.1} parent=39 // pred_fallthru
          _
      $region40: #{tpu_custom_call.1} parent=5 // pred_fallthru
        _
      %p1489 = scmp.le.s32.totalorder 2, %s16
      // Predicated region
      $region53: #{tpu_custom_call.1} parent=5 // pred_check
        %p1490 = pneg %p1489
      $region54: #{tpu_custom_call.1} parent=5 // pred_check_branch
        %1492 = sbr.rel (%p1490) target = $region56
      $region55: #{tpu_custom_call.1} parent=5 // pred_region
        %s1493 = ssub.s32 %s16, 2
        // Predicated region
        $region57: #{tpu_custom_call.1} parent=55 // pred_check
          %p1494 = pneg %p155
        $region58: #{tpu_custom_call.1} parent=55 // pred_check_branch
          %1496 = sbr.rel (%p1494) target = $region60
        $region59: #{tpu_custom_call.1} parent=55 // pred_region
          %s1497 = sand.u32 %s140, 1
          %s1498 = scalar_lea.sflag [#allocation4], %s1497
          %s1499 = sand.u32 %s140, 1
          %s1500 = smul.addr %s1499, 128
          %s1501 = scalar_lea.vmem [#allocation7], %s1500
          %1502 = dma.done %s1498, 2048
        $region60: #{tpu_custom_call.1} parent=55 // pred_fallthru
          _
      $region56: #{tpu_custom_call.1} parent=5 // pred_fallthru
        _
    $region6: #{tpu_custom_call.1} parent=1 // loop_footer
      %s20 = sadd.s32 1, %s16
    $region7: #{tpu_custom_call.1} parent=1 // loop_footer_branch
      %15 = sbr.rel target = $region3
    $region8: #{tpu_custom_call.1} parent=1 // loop_exit
      _
    %1503 = vsyncpa [#allocation3], 1
    %s1504 = scalar_lea.sflag [#allocation3], 1
    %1505 = vsyncpa %s1504, 1
    %1506 = vsyncpa [#allocation6], 1
    %1507 = vsyncpa [#allocation4], 1
    %s1508 = scalar_lea.sflag [#allocation4], 1
    %1509 = vsyncpa %s1508, 1

</llo_original>
